<compile_context>
chip_gen: v7x
topology: tpu7x:2x2x1
jax: 0.10.0
libtpu: 0.0.40
codegen_flags: <defaults>
</compile_context>

<pallas_src>
import jax
import jax.numpy as jnp
from jax import lax
from jax.experimental import pallas as pl
from jax.experimental.pallas import tpu as pltpu


_REDUCE_CHUNK = 16  # sublane-aligned HW chunk for the streaming bf16->f32 reduction


def _head_kernel(x_ref, w1_ref, w2_ref, wc1_ref, bc1_ref, wc2_ref, bc2_ref, out_ref):
    """SE attention + global avg pool + 2-layer classifier for one batch tile.

    x_ref   : (Bt, HW, C)   backbone features, channels-last (bf16)
    w1_ref  : (C, C//r)     SE fc1 weight (pre-transposed, no bias, bf16)
    w2_ref  : (C//r, C)     SE fc2 weight (pre-transposed, no bias, bf16)
    wc1_ref : (C, 512)      classifier fc1 weight (pre-transposed, bf16)
    bc1_ref : (1, 512)      classifier fc1 bias (f32)
    wc2_ref : (512, NCp)    classifier fc2 weight (pre-transposed, lane-padded, bf16)
    bc2_ref : (1, NCp)      classifier fc2 bias (lane-padded, f32)
    out_ref : (Bt, NCp)     logits (lane-padded, f32)
    """
    bt, hw, c = x_ref.shape
    inv_hw = jnp.float32(1.0 / hw)

    # --- SEModule: AdaptiveAvgPool2d(1).view(b, c), streamed in sublane chunks ---
    # Never materialize the full (Bt, HW, C) tile in f32: cast + reduce chunk by chunk.
    ch = _REDUCE_CHUNK if hw >= _REDUCE_CHUNK else hw
    n_full = hw // ch
    y = jnp.zeros((bt, c), jnp.float32)
    if n_full > 0:
        def body(i, acc):
            off = pl.multiple_of(i * ch, ch)
            blk = x_ref[:, pl.ds(off, ch), :].astype(jnp.float32)
            return acc + jnp.sum(blk, axis=1)
        y = lax.fori_loop(0, n_full, body, y)
    rem = hw - n_full * ch
    if rem > 0:
        blk = x_ref[:, pl.ds(n_full * ch, rem), :].astype(jnp.float32)
        y = y + jnp.sum(blk, axis=1)
    y = y * inv_hw                                        # (Bt, C) f32 pooled mean

    # Linear(C, C//r, bias=False) -> ReLU   (bf16 operands, f32 accumulation)
    h = jnp.dot(y.astype(w1_ref.dtype), w1_ref[...],
                preferred_element_type=jnp.float32)
    h = jnp.maximum(h, 0.0)                               # (Bt, C//r)
    # Linear(C//r, C, bias=False) -> Sigmoid
    g = jnp.dot(h.astype(w2_ref.dtype), w2_ref[...],
                preferred_element_type=jnp.float32)
    g = jax.nn.sigmoid(g)                                 # (Bt, C)

    # --- x * g then AdaptiveAvgPool2d(1) + flatten ---
    # g is constant along HW, so mean_hw(x * g) == g * mean_hw(x) = g * y (exact).
    pooled = y * g                                        # (Bt, C)

    # --- classifier: Linear(C,512) -> ReLU -> Dropout(0.5) -> Linear(512, NC) ---
    z = jnp.dot(pooled.astype(wc1_ref.dtype), wc1_ref[...],
                preferred_element_type=jnp.float32) + bc1_ref[...]
    z = jnp.maximum(z, 0.0)                               # (Bt, 512)
    # TODO(synk): Dropout(0.5) is identity in eval mode; training-mode masking not implemented.
    logits = jnp.dot(z.astype(wc2_ref.dtype), wc2_ref[...],
                     preferred_element_type=jnp.float32) + bc2_ref[...]
    out_ref[...] = logits                                 # (Bt, NCp)


def _round_up(a, m):
    return ((a + m - 1) // m) * m


def _vmem_capacity_bytes():
    """Generation-aware VMEM capacity; conservative (v7x-sized) fallback."""
    try:
        info = pltpu.get_tpu_info()
        cap = getattr(info, "vmem_capacity_bytes", None)
        if cap:
            return int(cap)
    except Exception:
        pass
    return 64 * 1024 * 1024


def _pick_tiling(B, HW, C, x_itemsize, nc_pad, weight_bytes):
    """Choose batch tile + scoped vmem limit, aware of generation & layout padding."""
    vmem_cap = _vmem_capacity_bytes()
    # Scoped target: leave headroom below physical capacity (v7x: 64 MiB -> ~48 MiB,
    # v5e/v6e: 128 MiB -> ~100 MiB; bigger tiles amortize the ~0.35us per-step cost).
    scoped_target = 48 * 2**20 if vmem_cap <= 64 * 2**20 else 100 * 2**20

    sub = 8 * (4 // x_itemsize)              # sublane tile rows: 8 (f32) / 16 (bf16)
    hw_pad = _round_up(HW, sub)              # e.g. ResNet HW=49 pads to 64 for bf16
    c_pad = _round_up(C, 128)

    # Double-buffered weights assumed (conservative; Buffered(1) only adds headroom).
    fixed = 2 * weight_bytes + 6 * 2**20     # + compiler-internal scratch headroom
    per_bt = (2 * hw_pad * c_pad * x_itemsize        # double-buffered x block
              + 2 * nc_pad * 4                        # double-buffered out block (f32)
              + 2 * _REDUCE_CHUNK * c_pad * 4         # f32 chunk temporaries in reduce
              + 4 * c_pad * 4)                        # y/g/pooled-sized f32 temporaries

    budget = max(scoped_target - fixed, per_bt)
    bt = max(1, min(B, budget // per_bt))
    # Guarantee >=2 grid steps for reasonable batches so both TensorCores of a
    # dual-core part (v7x) get work.
    if B >= 16:
        bt = min(bt, _round_up((B + 1) // 2, 8))
    if bt < B:
        bt = max(8, (bt // 8) * 8)           # 8-aligned second-minor for the out block
    else:
        bt = B

    vmem_limit = int(min(max(fixed + bt * per_bt + 2 * 2**20, 32 * 2**20),
                         scoped_target))
    return int(bt), vmem_limit


def _build_call(B, HW, C, x_dtype, nc_pad, bt, vmem_limit, weight_arrays,
                single_buffer_weights):
    wmode = pl.Buffered(1) if single_buffer_weights else None

    def wspec(arr):
        nd = arr.ndim
        return pl.BlockSpec(arr.shape, lambda b, _nd=nd: (0,) * _nd,
                            pipeline_mode=wmode)

    return pl.pallas_call(
        _head_kernel,
        out_shape=jax.ShapeDtypeStruct((B, nc_pad), jnp.float32),
        grid=(pl.cdiv(B, bt),),
        in_specs=[pl.BlockSpec((bt, HW, C), lambda b: (b, 0, 0))]    # pipelined over batch
                 + [wspec(a) for a in weight_arrays],                # weights stay resident
        out_specs=pl.BlockSpec((bt, nc_pad), lambda b: (b, 0)),
        compiler_params=pltpu.CompilerParams(
            dimension_semantics=("parallel",),
            vmem_limit_bytes=vmem_limit,
        ),
    )


def multi_label_head(features_nhwc, params, *, x_dtype=jnp.bfloat16,
                     weight_dtype=jnp.bfloat16):
    """features_nhwc: (B, H, W, C) backbone feature map, channels-last (TPU-native).

    Pass the features already in bf16 NHWC to avoid any wrapper-side relayout/cast
    (that standalone transpose would dominate this memory-bound head's wall time).
    """
    B, H, W, C = features_nhwc.shape
    HW = H * W
    x = features_nhwc.reshape(B, HW, C)
    if x.dtype != x_dtype:
        x = x.astype(x_dtype)            # no-op when the producer already emits bf16

    w1t, w2t, wc1t, bc1, wc2t, bc2 = params
    num_classes = wc2t.shape[1]

    # bf16 weights (MXU-native operands, halves resident VMEM + DMA), f32 biases.
    w1t = w1t.astype(weight_dtype)
    w2t = w2t.astype(weight_dtype)
    wc1t = wc1t.astype(weight_dtype)
    wc2t = wc2t.astype(weight_dtype)
    bc1 = bc1.astype(jnp.float32)
    bc2 = bc2.astype(jnp.float32)

    # Lane-dense output: pad the class dim up to a multiple of 128 inside the kernel.
    nc_pad = _round_up(num_classes, 128)
    wc2p = jnp.pad(wc2t, ((0, 0), (0, nc_pad - num_classes)))
    bc2p = jnp.pad(bc2, ((0, 0), (0, nc_pad - num_classes)))

    weight_arrays = (w1t, w2t, wc1t, bc1, wc2p, bc2p)
    weight_bytes = sum(int(a.size) * a.dtype.itemsize for a in weight_arrays)

    itemsize = jnp.dtype(x_dtype).itemsize
    bt, vmem_limit = _pick_tiling(B, HW, C, itemsize, nc_pad, weight_bytes)

    args = (x,) + weight_arrays
    try:
        # Preferred: single-buffer the constant-index weights (saves VMEM headroom).
        call = _build_call(B, HW, C, x_dtype, nc_pad, bt, vmem_limit, weight_arrays,
                           single_buffer_weights=True)
        out_padded = jax.block_until_ready(call(*args))
    except Exception:
        # Fallback: default (double) buffering — budget already accounts for it.
        call = _build_call(B, HW, C, x_dtype, nc_pad, bt, vmem_limit, weight_arrays,
                           single_buffer_weights=False)
        out_padded = jax.block_until_ready(call(*args))

    return out_padded[:, :num_classes]


def init_params(key, channels, num_classes, reduction=16, hidden=512):
    """Deterministic synthetic parameters matching the PyTorch module shapes.

    PyTorch Linear stores weight as (out, in); we pre-transpose to (in, out)
    so the kernel computes y @ W^T directly as y @ W_t.
    """
    k1, k2, k3, k4, k5, k6 = jax.random.split(key, 6)
    cr = channels // reduction
    scale = 0.05
    w1 = jax.random.normal(k1, (cr, channels), jnp.float32) * scale       # SE fc1 (out,in)
    w2 = jax.random.normal(k2, (channels, cr), jnp.float32) * scale       # SE fc2 (out,in)
    wc1 = jax.random.normal(k3, (hidden, channels), jnp.float32) * scale  # cls fc1 (out,in)
    bc1 = jax.random.normal(k4, (hidden,), jnp.float32) * scale
    wc2 = jax.random.normal(k5, (num_classes, hidden), jnp.float32) * scale
    bc2 = jax.random.normal(k6, (num_classes,), jnp.float32) * scale
    return (
        w1.T,                      # (C, C//r)
        w2.T,                      # (C//r, C)
        wc1.T,                     # (C, 512)
        bc1.reshape(1, hidden),    # (1, 512)
        wc2.T,                     # (512, NC)
        bc2.reshape(1, num_classes),
    )


def cast_weights(params, dtype):
    """Cast the four weight matrices (keep biases f32)."""
    w1t, w2t, wc1t, bc1, wc2t, bc2 = params
    return (w1t.astype(dtype), w2t.astype(dtype), wc1t.astype(dtype), bc1,
            wc2t.astype(dtype), bc2)


def reference_head(features_nhwc, params):
    """Pure-JAX reference following the PyTorch forward literally (two passes over x)."""
    w1t, w2t, wc1t, bc1, wc2t, bc2 = params
    x = features_nhwc.astype(jnp.float32)                  # (B, H, W, C)
    y = jnp.mean(x, axis=(1, 2))                           # AdaptiveAvgPool2d(1) -> (B, C)
    h = jnp.maximum(y @ w1t.astype(jnp.float32), 0.0)
    g = jax.nn.sigmoid(h @ w2t.astype(jnp.float32))
    scaled = x * g[:, None, None, :]                       # SE rescale
    pooled = jnp.mean(scaled, axis=(1, 2))                 # pool + flatten
    z = jnp.maximum(pooled @ wc1t.astype(jnp.float32) + bc1, 0.0)
    return z @ wc2t.astype(jnp.float32) + bc2


if __name__ == "__main__":
    B, C, H, W = 2, 64, 16, 16        # small synthetic backbone feature map
    num_classes = 3
    reduction = 16

    key = jax.random.PRNGKey(0)
    kx, kp = jax.random.split(key)
    # Backbone features already in NHWC / bf16 (TPU-native layout) -> no wrapper relayout.
    features = jax.random.normal(kx, (B, H, W, C), jnp.float32).astype(jnp.bfloat16)
    params = init_params(kp, C, num_classes, reduction=reduction, hidden=512)
    # Same bf16-rounded weights feed both kernel and reference so the comparison stays tight.
    params_bf16 = cast_weights(params, jnp.bfloat16)

    out = multi_label_head(features, params_bf16)
    out = jax.block_until_ready(out)

    ref = reference_head(features, params_bf16)
    assert out.shape == (B, num_classes)
    assert jnp.allclose(out, ref, atol=2e-3, rtol=2e-3), (out, ref)
    print("KERNEL_OK")
</pallas_src>

<mosaic_0001>
module attributes {stable_mosaic.version = 11 : i64} {
  func.func @_head_kernel(%arg0: i32, %arg1: memref<2x256x64xbf16, #tpu.memory_space<vmem>>, %arg2: memref<64x4xbf16, #tpu.memory_space<vmem>>, %arg3: memref<4x64xbf16, #tpu.memory_space<vmem>>, %arg4: memref<64x512xbf16, #tpu.memory_space<vmem>>, %arg5: memref<1x512xf32, #tpu.memory_space<vmem>>, %arg6: memref<512x128xbf16, #tpu.memory_space<vmem>>, %arg7: memref<1x128xf32, #tpu.memory_space<vmem>>, %arg8: memref<2x128xf32, #tpu.memory_space<vmem>>) attributes {dimension_semantics = [#tpu.dimension_semantics<parallel>], iteration_bounds = array<i64: 1>, scalar_prefetch = 0 : i64, scratch_operands = 0 : i64, tpu.core_type = #tpu.core_type<tc>, window_params = [{transform_indices = @transform_0, window_bounds = array<i64: 2, 256, 64>}, {pipeline_mode = #tpu.pipeline_mode<synchronous>, transform_indices = @transform_1, window_bounds = array<i64: 64, 4>}, {pipeline_mode = #tpu.pipeline_mode<synchronous>, transform_indices = @transform_2, window_bounds = array<i64: 4, 64>}, {pipeline_mode = #tpu.pipeline_mode<synchronous>, transform_indices = @transform_3, window_bounds = array<i64: 64, 512>}, {pipeline_mode = #tpu.pipeline_mode<synchronous>, transform_indices = @transform_4, window_bounds = array<i64: 1, 512>}, {pipeline_mode = #tpu.pipeline_mode<synchronous>, transform_indices = @transform_5, window_bounds = array<i64: 512, 128>}, {pipeline_mode = #tpu.pipeline_mode<synchronous>, transform_indices = @transform_6, window_bounds = array<i64: 1, 128>}, {transform_indices = @transform_7, window_bounds = array<i64: 2, 128>}]} {
    %cst = arith.constant 0.000000e+00 : f32
    %0 = vector.broadcast %cst : f32 to vector<2x64xf32>
    %c0_i32 = arith.constant 0 : i32
    %c16_i32 = arith.constant 16 : i32
    %1 = arith.addi %c0_i32, %c16_i32 : i32
    %c1_i32 = arith.constant 1 : i32
    %2 = scf.for %arg9 = %c0_i32 to %1 step %c1_i32 iter_args(%arg10 = %0) -> (vector<2x64xf32>)  : i32 {
      %c16_i32_22 = arith.constant 16 : i32
      %34 = arith.muli %arg9, %c16_i32_22 : i32
      %35 = tpu.assume_multiple %34, 16 : i32
      %c0_23 = arith.constant 0 : index
      %36 = arith.index_cast %35 : i32 to index
      %c0_24 = arith.constant 0 : index
      %37 = vector.load %arg1[%c0_23, %36, %c0_24] : memref<2x256x64xbf16, #tpu.memory_space<vmem>>, vector<2x16x64xbf16>
      %38 = arith.extf %37 : vector<2x16x64xbf16> to vector<2x16x64xf32>
      %cst_25 = arith.constant dense<0.000000e+00> : vector<2x64xf32>
      %39 = vector.multi_reduction <add>, %38, %cst_25 [1] : vector<2x16x64xf32> to vector<2x64xf32>
      %40 = arith.addf %arg10, %39 : vector<2x64xf32>
      scf.yield %40 : vector<2x64xf32>
    }
    %c16_i32_0 = arith.constant 16 : i32
    %cst_1 = arith.constant 3.906250e-03 : f32
    %3 = vector.broadcast %cst_1 : f32 to vector<2x64xf32>
    %4 = arith.mulf %2, %3 : vector<2x64xf32>
    %5 = arith.truncf %4 : vector<2x64xf32> to vector<2x64xbf16>
    %c0 = arith.constant 0 : index
    %c0_2 = arith.constant 0 : index
    %6 = vector.load %arg2[%c0, %c0_2] : memref<64x4xbf16, #tpu.memory_space<vmem>>, vector<64x4xbf16>
    %cst_3 = arith.constant dense<0.000000e+00> : vector<2x4xf32>
    %7 = tpu.matmul %5, %6, %cst_3 {dimension_numbers = #tpu.dot_dimension_numbers<[1], [0], [0], [1], [0, 0, 1, 1], [], []>} : vector<2x64xbf16>, vector<64x4xbf16>, vector<2x4xf32> -> vector<2x4xf32>
    %cst_4 = arith.constant 0.000000e+00 : f32
    %8 = vector.broadcast %cst_4 : f32 to vector<2x4xf32>
    %9 = arith.maximumf %7, %8 : vector<2x4xf32>
    %10 = arith.truncf %9 : vector<2x4xf32> to vector<2x4xbf16>
    %c0_5 = arith.constant 0 : index
    %c0_6 = arith.constant 0 : index
    %11 = vector.load %arg3[%c0_5, %c0_6] : memref<4x64xbf16, #tpu.memory_space<vmem>>, vector<4x64xbf16>
    %cst_7 = arith.constant dense<0.000000e+00> : vector<2x64xf32>
    %12 = tpu.matmul %10, %11, %cst_7 {dimension_numbers = #tpu.dot_dimension_numbers<[1], [0], [0], [1], [0, 0, 1, 1], [], []>} : vector<2x4xbf16>, vector<4x64xbf16>, vector<2x64xf32> -> vector<2x64xf32>
    %13 = arith.negf %12 : vector<2x64xf32>
    %14 = math.exp %13 : vector<2x64xf32>
    %cst_8 = arith.constant 1.000000e+00 : f32
    %15 = vector.broadcast %cst_8 : f32 to vector<2x64xf32>
    %16 = arith.addf %15, %14 : vector<2x64xf32>
    %17 = arith.divf %15, %16 : vector<2x64xf32>
    %18 = arith.mulf %4, %17 : vector<2x64xf32>
    %19 = arith.truncf %18 : vector<2x64xf32> to vector<2x64xbf16>
    %c0_9 = arith.constant 0 : index
    %c0_10 = arith.constant 0 : index
    %20 = vector.load %arg4[%c0_9, %c0_10] : memref<64x512xbf16, #tpu.memory_space<vmem>>, vector<64x512xbf16>
    %cst_11 = arith.constant dense<0.000000e+00> : vector<2x512xf32>
    %21 = tpu.matmul %19, %20, %cst_11 {dimension_numbers = #tpu.dot_dimension_numbers<[1], [0], [0], [1], [0, 0, 1, 1], [], []>} : vector<2x64xbf16>, vector<64x512xbf16>, vector<2x512xf32> -> vector<2x512xf32>
    %c0_12 = arith.constant 0 : index
    %c0_13 = arith.constant 0 : index
    %22 = vector.load %arg5[%c0_12, %c0_13] : memref<1x512xf32, #tpu.memory_space<vmem>>, vector<1x512xf32>
    %23 = vector.broadcast %22 : vector<1x512xf32> to vector<2x512xf32>
    %24 = arith.addf %21, %23 : vector<2x512xf32>
    %cst_14 = arith.constant 0.000000e+00 : f32
    %25 = vector.broadcast %cst_14 : f32 to vector<2x512xf32>
    %26 = arith.maximumf %24, %25 : vector<2x512xf32>
    %27 = arith.truncf %26 : vector<2x512xf32> to vector<2x512xbf16>
    %c0_15 = arith.constant 0 : index
    %c0_16 = arith.constant 0 : index
    %28 = vector.load %arg6[%c0_15, %c0_16] : memref<512x128xbf16, #tpu.memory_space<vmem>>, vector<512x128xbf16>
    %cst_17 = arith.constant dense<0.000000e+00> : vector<2x128xf32>
    %29 = tpu.matmul %27, %28, %cst_17 {dimension_numbers = #tpu.dot_dimension_numbers<[1], [0], [0], [1], [0, 0, 1, 1], [], []>} : vector<2x512xbf16>, vector<512x128xbf16>, vector<2x128xf32> -> vector<2x128xf32>
    %c0_18 = arith.constant 0 : index
    %c0_19 = arith.constant 0 : index
    %30 = vector.load %arg7[%c0_18, %c0_19] : memref<1x128xf32, #tpu.memory_space<vmem>>, vector<1x128xf32>
    %31 = vector.broadcast %30 : vector<1x128xf32> to vector<2x128xf32>
    %32 = arith.addf %29, %31 : vector<2x128xf32>
    %c0_20 = arith.constant 0 : index
    %c0_21 = arith.constant 0 : index
    %33 = vector.load %arg8[%c0_20, %c0_21] : memref<2x128xf32, #tpu.memory_space<vmem>>, vector<2x128xf32>
    tpu.vector_store %arg8[%c0_20, %c0_21], %32 {strides = array<i32>} : memref<2x128xf32, #tpu.memory_space<vmem>>, vector<2x128xf32>,
    return
  }
  func.func @transform_0(%arg0: i32) -> (i32, i32, i32) {
    %c0_i32 = arith.constant 0 : i32
    %c0_i32_0 = arith.constant 0 : i32
    %c0_i32_1 = arith.constant 0 : i32
    return %arg0, %c0_i32, %c0_i32_0 : i32, i32, i32
  }
  func.func @transform_1(%arg0: i32) -> (i32, i32) {
    %c0_i32 = arith.constant 0 : i32
    %c0_i32_0 = arith.constant 0 : i32
    %c0_i32_1 = arith.constant 0 : i32
    return %c0_i32, %c0_i32_0 : i32, i32
  }
  func.func @transform_2(%arg0: i32) -> (i32, i32) {
    %c0_i32 = arith.constant 0 : i32
    %c0_i32_0 = arith.constant 0 : i32
    %c0_i32_1 = arith.constant 0 : i32
    return %c0_i32, %c0_i32_0 : i32, i32
  }
  func.func @transform_3(%arg0: i32) -> (i32, i32) {
    %c0_i32 = arith.constant 0 : i32
    %c0_i32_0 = arith.constant 0 : i32
    %c0_i32_1 = arith.constant 0 : i32
    return %c0_i32, %c0_i32_0 : i32, i32
  }
  func.func @transform_4(%arg0: i32) -> (i32, i32) {
    %c0_i32 = arith.constant 0 : i32
    %c0_i32_0 = arith.constant 0 : i32
    %c0_i32_1 = arith.constant 0 : i32
    return %c0_i32, %c0_i32_0 : i32, i32
  }
  func.func @transform_5(%arg0: i32) -> (i32, i32) {
    %c0_i32 = arith.constant 0 : i32
    %c0_i32_0 = arith.constant 0 : i32
    %c0_i32_1 = arith.constant 0 : i32
    return %c0_i32, %c0_i32_0 : i32, i32
  }
  func.func @transform_6(%arg0: i32) -> (i32, i32) {
    %c0_i32 = arith.constant 0 : i32
    %c0_i32_0 = arith.constant 0 : i32
    %c0_i32_1 = arith.constant 0 : i32
    return %c0_i32, %c0_i32_0 : i32, i32
  }
  func.func @transform_7(%arg0: i32) -> (i32, i32) {
    %c0_i32 = arith.constant 0 : i32
    %c0_i32_0 = arith.constant 0 : i32
    return %arg0, %c0_i32 : i32, i32
  }
}

module attributes {stable_mosaic.version = 11 : i64} {
  func.func @_head_kernel(%arg0: i32, %arg1: memref<2x256x64xbf16, #tpu.memory_space<vmem>>, %arg2: memref<64x4xbf16, #tpu.memory_space<vmem>>, %arg3: memref<4x64xbf16, #tpu.memory_space<vmem>>, %arg4: memref<64x512xbf16, #tpu.memory_space<vmem>>, %arg5: memref<1x512xf32, #tpu.memory_space<vmem>>, %arg6: memref<512x128xbf16, #tpu.memory_space<vmem>>, %arg7: memref<1x128xf32, #tpu.memory_space<vmem>>, %arg8: memref<2x128xf32, #tpu.memory_space<vmem>>) attributes {dimension_semantics = [#tpu.dimension_semantics<parallel>], iteration_bounds = array<i64: 1>, scalar_prefetch = 0 : i64, scratch_operands = 0 : i64, tpu.core_type = #tpu.core_type<tc>, window_params = [{transform_indices = @transform_0, window_bounds = array<i64: 2, 256, 64>}, {pipeline_mode = #tpu.pipeline_mode<synchronous>, transform_indices = @transform_1, window_bounds = array<i64: 64, 4>}, {pipeline_mode = #tpu.pipeline_mode<synchronous>, transform_indices = @transform_2, window_bounds = array<i64: 4, 64>}, {pipeline_mode = #tpu.pipeline_mode<synchronous>, transform_indices = @transform_3, window_bounds = array<i64: 64, 512>}, {pipeline_mode = #tpu.pipeline_mode<synchronous>, transform_indices = @transform_4, window_bounds = array<i64: 1, 512>}, {pipeline_mode = #tpu.pipeline_mode<synchronous>, transform_indices = @transform_5, window_bounds = array<i64: 512, 128>}, {pipeline_mode = #tpu.pipeline_mode<synchronous>, transform_indices = @transform_6, window_bounds = array<i64: 1, 128>}, {transform_indices = @transform_7, window_bounds = array<i64: 2, 128>}]} {
    %cst = arith.constant 0.000000e+00 : f32
    %0 = vector.broadcast %cst : f32 to vector<2x64xf32>
    %c0_i32 = arith.constant 0 : i32
    %c16_i32 = arith.constant 16 : i32
    %1 = arith.addi %c0_i32, %c16_i32 : i32
    %c1_i32 = arith.constant 1 : i32
    %2 = scf.for %arg9 = %c0_i32 to %1 step %c1_i32 iter_args(%arg10 = %0) -> (vector<2x64xf32>)  : i32 {
      %c16_i32_22 = arith.constant 16 : i32
      %34 = arith.muli %arg9, %c16_i32_22 : i32
      %35 = tpu.assume_multiple %34, 16 : i32
      %c0_23 = arith.constant 0 : index
      %36 = arith.index_cast %35 : i32 to index
      %c0_24 = arith.constant 0 : index
      %37 = vector.load %arg1[%c0_23, %36, %c0_24] : memref<2x256x64xbf16, #tpu.memory_space<vmem>>, vector<2x16x64xbf16>
      %38 = arith.extf %37 : vector<2x16x64xbf16> to vector<2x16x64xf32>
      %cst_25 = arith.constant dense<0.000000e+00> : vector<2x64xf32>
      %39 = vector.multi_reduction <add>, %38, %cst_25 [1] : vector<2x16x64xf32> to vector<2x64xf32>
      %40 = arith.addf %arg10, %39 : vector<2x64xf32>
      scf.yield %40 : vector<2x64xf32>
    }
    %c16_i32_0 = arith.constant 16 : i32
    %cst_1 = arith.constant 3.906250e-03 : f32
    %3 = vector.broadcast %cst_1 : f32 to vector<2x64xf32>
    %4 = arith.mulf %2, %3 : vector<2x64xf32>
    %5 = arith.truncf %4 : vector<2x64xf32> to vector<2x64xbf16>
    %c0 = arith.constant 0 : index
    %c0_2 = arith.constant 0 : index
    %6 = vector.load %arg2[%c0, %c0_2] : memref<64x4xbf16, #tpu.memory_space<vmem>>, vector<64x4xbf16>
    %cst_3 = arith.constant dense<0.000000e+00> : vector<2x4xf32>
    %7 = tpu.matmul %5, %6, %cst_3 {dimension_numbers = #tpu.dot_dimension_numbers<[1], [0], [0], [1], [0, 0, 1, 1], [], []>} : vector<2x64xbf16>, vector<64x4xbf16>, vector<2x4xf32> -> vector<2x4xf32>
    %cst_4 = arith.constant 0.000000e+00 : f32
    %8 = vector.broadcast %cst_4 : f32 to vector<2x4xf32>
    %9 = arith.maximumf %7, %8 : vector<2x4xf32>
    %10 = arith.truncf %9 : vector<2x4xf32> to vector<2x4xbf16>
    %c0_5 = arith.constant 0 : index
    %c0_6 = arith.constant 0 : index
    %11 = vector.load %arg3[%c0_5, %c0_6] : memref<4x64xbf16, #tpu.memory_space<vmem>>, vector<4x64xbf16>
    %cst_7 = arith.constant dense<0.000000e+00> : vector<2x64xf32>
    %12 = tpu.matmul %10, %11, %cst_7 {dimension_numbers = #tpu.dot_dimension_numbers<[1], [0], [0], [1], [0, 0, 1, 1], [], []>} : vector<2x4xbf16>, vector<4x64xbf16>, vector<2x64xf32> -> vector<2x64xf32>
    %13 = arith.negf %12 : vector<2x64xf32>
    %14 = math.exp %13 : vector<2x64xf32>
    %cst_8 = arith.constant 1.000000e+00 : f32
    %15 = vector.broadcast %cst_8 : f32 to vector<2x64xf32>
    %16 = arith.addf %15, %14 : vector<2x64xf32>
    %17 = arith.divf %15, %16 : vector<2x64xf32>
    %18 = arith.mulf %4, %17 : vector<2x64xf32>
    %19 = arith.truncf %18 : vector<2x64xf32> to vector<2x64xbf16>
    %c0_9 = arith.constant 0 : index
    %c0_10 = arith.constant 0 : index
    %20 = vector.load %arg4[%c0_9, %c0_10] : memref<64x512xbf16, #tpu.memory_space<vmem>>, vector<64x512xbf16>
    %cst_11 = arith.constant dense<0.000000e+00> : vector<2x512xf32>
    %21 = tpu.matmul %19, %20, %cst_11 {dimension_numbers = #tpu.dot_dimension_numbers<[1], [0], [0], [1], [0, 0, 1, 1], [], []>} : vector<2x64xbf16>, vector<64x512xbf16>, vector<2x512xf32> -> vector<2x512xf32>
    %c0_12 = arith.constant 0 : index
    %c0_13 = arith.constant 0 : index
    %22 = vector.load %arg5[%c0_12, %c0_13] : memref<1x512xf32, #tpu.memory_space<vmem>>, vector<1x512xf32>
    %23 = vector.broadcast %22 : vector<1x512xf32> to vector<2x512xf32>
    %24 = arith.addf %21, %23 : vector<2x512xf32>
    %cst_14 = arith.constant 0.000000e+00 : f32
    %25 = vector.broadcast %cst_14 : f32 to vector<2x512xf32>
    %26 = arith.maximumf %24, %25 : vector<2x512xf32>
    %27 = arith.truncf %26 : vector<2x512xf32> to vector<2x512xbf16>
    %c0_15 = arith.constant 0 : index
    %c0_16 = arith.constant 0 : index
    %28 = vector.load %arg6[%c0_15, %c0_16] : memref<512x128xbf16, #tpu.memory_space<vmem>>, vector<512x128xbf16>
    %cst_17 = arith.constant dense<0.000000e+00> : vector<2x128xf32>
    %29 = tpu.matmul %27, %28, %cst_17 {dimension_numbers = #tpu.dot_dimension_numbers<[1], [0], [0], [1], [0, 0, 1, 1], [], []>} : vector<2x512xbf16>, vector<512x128xbf16>, vector<2x128xf32> -> vector<2x128xf32>
    %c0_18 = arith.constant 0 : index
    %c0_19 = arith.constant 0 : index
    %30 = vector.load %arg7[%c0_18, %c0_19] : memref<1x128xf32, #tpu.memory_space<vmem>>, vector<1x128xf32>
    %31 = vector.broadcast %30 : vector<1x128xf32> to vector<2x128xf32>
    %32 = arith.addf %29, %31 : vector<2x128xf32>
    %c0_20 = arith.constant 0 : index
    %c0_21 = arith.constant 0 : index
    %33 = vector.load %arg8[%c0_20, %c0_21] : memref<2x128xf32, #tpu.memory_space<vmem>>, vector<2x128xf32>
    tpu.vector_store %arg8[%c0_20, %c0_21], %32 {strides = array<i32>} : memref<2x128xf32, #tpu.memory_space<vmem>>, vector<2x128xf32>,
    return
  }
  func.func @transform_0(%arg0: i32) -> (i32, i32, i32) {
    %c0_i32 = arith.constant 0 : i32
    %c0_i32_0 = arith.constant 0 : i32
    %c0_i32_1 = arith.constant 0 : i32
    return %arg0, %c0_i32, %c0_i32_0 : i32, i32, i32
  }
  func.func @transform_1(%arg0: i32) -> (i32, i32) {
    %c0_i32 = arith.constant 0 : i32
    %c0_i32_0 = arith.constant 0 : i32
    %c0_i32_1 = arith.constant 0 : i32
    return %c0_i32, %c0_i32_0 : i32, i32
  }
  func.func @transform_2(%arg0: i32) -> (i32, i32) {
    %c0_i32 = arith.constant 0 : i32
    %c0_i32_0 = arith.constant 0 : i32
    %c0_i32_1 = arith.constant 0 : i32
    return %c0_i32, %c0_i32_0 : i32, i32
  }
  func.func @transform_3(%arg0: i32) -> (i32, i32) {
    %c0_i32 = arith.constant 0 : i32
    %c0_i32_0 = arith.constant 0 : i32
    %c0_i32_1 = arith.constant 0 : i32
    return %c0_i32, %c0_i32_0 : i32, i32
  }
  func.func @transform_4(%arg0: i32) -> (i32, i32) {
    %c0_i32 = arith.constant 0 : i32
    %c0_i32_0 = arith.constant 0 : i32
    %c0_i32_1 = arith.constant 0 : i32
    return %c0_i32, %c0_i32_0 : i32, i32
  }
  func.func @transform_5(%arg0: i32) -> (i32, i32) {
    %c0_i32 = arith.constant 0 : i32
    %c0_i32_0 = arith.constant 0 : i32
    %c0_i32_1 = arith.constant 0 : i32
    return %c0_i32, %c0_i32_0 : i32, i32
  }
  func.func @transform_6(%arg0: i32) -> (i32, i32) {
    %c0_i32 = arith.constant 0 : i32
    %c0_i32_0 = arith.constant 0 : i32
    %c0_i32_1 = arith.constant 0 : i32
    return %c0_i32, %c0_i32_0 : i32, i32
  }
  func.func @transform_7(%arg0: i32) -> (i32, i32) {
    %c0_i32 = arith.constant 0 : i32
    %c0_i32_0 = arith.constant 0 : i32
    return %arg0, %c0_i32 : i32, i32
  }
}

</mosaic_0001>

<llo_original>
// kernel: tpu_custom_call.1
$region0: #{tpu_custom_call.1}
  #allocation0 [shape = 'u32[]', space=smem, size = 0x4, offset = 0x4, fixed_abs, tag = 'smem constant byte address 0x4 - core index']
  #allocation1 [shape = 'u32[144,128]{1,0:T(1,128)}', space=vmem, size = 0x12000, scoped, tag = 'internal scratch']
  %s0 = inlined_call_operand.vmem [shape: bf16[2,256,64], index: 0, kind: input, shape index: {}]
  %s1 = inlined_call_operand.vmem [shape: bf16[64,4], index: 1, kind: input, shape index: {}]
  %s2 = inlined_call_operand.vmem [shape: bf16[4,64], index: 2, kind: input, shape index: {}]
  %s3 = inlined_call_operand.vmem [shape: bf16[64,512], index: 3, kind: input, shape index: {}]
  %s4 = inlined_call_operand.vmem [shape: f32[1,512], index: 4, kind: input, shape index: {}]
  %s5 = inlined_call_operand.vmem [shape: bf16[512,128], index: 5, kind: input, shape index: {}]
  %s6 = inlined_call_operand.vmem [shape: f32[1,128], index: 6, kind: input, shape index: {}]
  %s7 = inlined_call_operand.hbm [shape: f32[2,128], index: 7, kind: output, shape index: {}]
  %s8 = sld [smem:[#allocation0]]
  $region45: #{tpu_custom_call.1} parent=0
    _
  %s10 = ssub.s32 1, %s8
  %s11 = scalar_select 0, %s10, %s8
  $region1: #{tpu_custom_call.1} parent=0
    #allocation2 [shape = 'u8[1024]{0}', space=vmem, size = 0x400, scoped, tag = 'output window, operand 0, single buffered']
    #allocation3 [shape = 's32[1]{0}', space=sflag, size = 0x4, scoped, tag = 'scoped memory for tpu_custom_call.1']
    %12 = vsyncpa [#allocation3], 0
    // Predicated region
    $region2: #{tpu_custom_call.1} parent=1 // pred_check
      _
    $region3: #{tpu_custom_call.1} parent=1 // pred_check_branch
      %14 = sbr.rel (0) target = $region5
    $region4: #{tpu_custom_call.1} parent=1 // pred_region
      _
    $region5: #{tpu_custom_call.1} parent=1 // pred_fallthru
      _
    // Predicated region
    $region6: #{tpu_custom_call.1} parent=1 // pred_check
      _
    $region7: #{tpu_custom_call.1} parent=1 // pred_check_branch
      %16 = sbr.rel (0) target = $region9
    $region8: #{tpu_custom_call.1} parent=1 // pred_region
      _
    $region9: #{tpu_custom_call.1} parent=1 // pred_fallthru
      _
    // Predicated region
    $region10: #{tpu_custom_call.1} parent=1 // pred_check
      _
    $region11: #{tpu_custom_call.1} parent=1 // pred_check_branch
      %18 = sbr.rel (0) target = $region13
    $region12: #{tpu_custom_call.1} parent=1 // pred_region
      _
    $region13: #{tpu_custom_call.1} parent=1 // pred_fallthru
      _
    // Predicated region
    $region14: #{tpu_custom_call.1} parent=1 // pred_check
      _
    $region15: #{tpu_custom_call.1} parent=1 // pred_check_branch
      %20 = sbr.rel (0) target = $region17
    $region16: #{tpu_custom_call.1} parent=1 // pred_region
      _
    $region17: #{tpu_custom_call.1} parent=1 // pred_fallthru
      _
    // Predicated region
    $region18: #{tpu_custom_call.1} parent=1 // pred_check
      _
    $region19: #{tpu_custom_call.1} parent=1 // pred_check_branch
      %22 = sbr.rel (0) target = $region21
    $region20: #{tpu_custom_call.1} parent=1 // pred_region
      _
    $region21: #{tpu_custom_call.1} parent=1 // pred_fallthru
      _
    // Predicated region
    $region22: #{tpu_custom_call.1} parent=1 // pred_check
      _
    $region23: #{tpu_custom_call.1} parent=1 // pred_check_branch
      %24 = sbr.rel (0) target = $region25
    $region24: #{tpu_custom_call.1} parent=1 // pred_region
      _
    $region25: #{tpu_custom_call.1} parent=1 // pred_fallthru
      _
    // Predicated region
    $region26: #{tpu_custom_call.1} parent=1 // pred_check
      _
    $region27: #{tpu_custom_call.1} parent=1 // pred_check_branch
      %26 = sbr.rel (0) target = $region29
    $region28: #{tpu_custom_call.1} parent=1 // pred_region
      _
    $region29: #{tpu_custom_call.1} parent=1 // pred_fallthru
      _
    loop: start=0, step=1, limit=16
    $region30: #{tpu_custom_call.1} parent=1 // loop_pre_header
      _
    $region31: #{tpu_custom_call.1} parent=1 // loop_header
      %s29 = sphi 0, %s33
      %p30 = scmp.ge.s32.totalorder %s29, 16
      %v34 = vphi 0.0, %v68
      %v35 = vphi 0.0, %v69
    $region32: #{tpu_custom_call.1} parent=1 // loop_header_branch
      %32 = sbr.rel (%p30) target = $region36
    $region33: #{tpu_custom_call.1} parent=1 // loop_body
      %s36 = smul.u32 %s29, 16
      %s37 = sshra.s32 %s36, 3
      %s38 = sand.u32 %s36, 7
      %s39 = smul.addr %s37, 4
      %s40 = scalar_lea.vmem %s0, %s39
      %v41 = vld [vmem:[%s40] sm:$0xf]
      %v42 = vld [vmem:[%s40 + $0x4] sm:$0xf]
      %v43 = vld [vmem:[%s40 + $0x80] sm:$0xf]
      %v44 = vld [vmem:[%s40 + $0x84] sm:$0xf]
      %v45 = vunpack.c.l.bf16 %v41
      %v46 = vunpack.c.l.bf16 %v42
      %v47 = vunpack.c.l.bf16 %v43
      %v48 = vunpack.c.l.bf16 %v44
      %vm49 = vcmask 523264
      %v50 = vsel %vm49, %v45, 0.0
      %v51 = vsel %vm49, %v46, 0.0
      %v52 = vadd.f32 %v50, %v51
      %v53 = vrot.slane %v52, 4
      %v54 = vadd.f32 %v52, %v53
      %v55 = vrot.slane %v54, 2
      %v56 = vadd.f32 %v54, %v55
      %v57 = vrot.slane %v56, 1
      %v58 = vadd.f32 %v56, %v57
      %v59 = vsel %vm49, %v47, 0.0
      %v60 = vsel %vm49, %v48, 0.0
      %v61 = vadd.f32 %v59, %v60
      %v62 = vrot.slane %v61, 4
      %v63 = vadd.f32 %v61, %v62
      %v64 = vrot.slane %v63, 2
      %v65 = vadd.f32 %v63, %v64
      %v66 = vrot.slane %v65, 1
      %v67 = vadd.f32 %v65, %v66
      %v68 = vadd.f32 %v34, %v58
      %v69 = vadd.f32 %v35, %v67
    $region34: #{tpu_custom_call.1} parent=1 // loop_footer
      %s33 = sadd.s32 1, %s29
    $region35: #{tpu_custom_call.1} parent=1 // loop_footer_branch
      %28 = sbr.rel target = $region31
    $region36: #{tpu_custom_call.1} parent=1 // loop_exit
      _
    %v70 = vmul.f32 %v34, 0.00390625
    %v71 = vmul.f32 %v35, 0.00390625
    %v72 = vpack.c.bf16 %v70, %v70
    %v73 = vpack.c.bf16 %v71, %v71
    %v74 = vld [vmem:[%s1] sm:$0xf]
    %v75 = vld [vmem:[%s1 + $0x4] sm:$0xf]
    %v76 = vld [vmem:[%s1 + $0x8] sm:$0xf]
    %v77 = vld [vmem:[%s1 + $0xc] sm:$0xf]
    %v78 = vld [vmem:[%s1 + $0x10] sm:$0xf]
    %v79 = vld [vmem:[%s1 + $0x14] sm:$0xf]
    %v80 = vld [vmem:[%s1 + $0x18] sm:$0xf]
    %v81 = vld [vmem:[%s1 + $0x1c] sm:$0xf]
    %v84 = vunpack.c.l.b16 %v72
    %v85 = vunpack.c.l.b16 %v73
    %vm86 = vcmask 1041409
    %v87 = vsel %vm86, %v85, %v84
    %v88 = vpack.c.b16 %v87, %v87
    %v97 = vunpack.c.l.b16 %v74
    %v98 = vunpack.c.l.b16 %v75
    %v99 = vunpack.c.l.b16 %v76
    %v100 = vunpack.c.l.b16 %v77
    %v101 = vunpack.c.l.b16 %v78
    %v102 = vunpack.c.l.b16 %v79
    %v103 = vunpack.c.l.b16 %v80
    %v104 = vunpack.c.l.b16 %v81
    %v105 = vpack.c.b16 %v98, %v97
    %v106 = vpack.c.b16 %v100, %v99
    %v107 = vpack.c.b16 %v102, %v101
    %v108 = vpack.c.b16 %v104, %v103
    %vm113 = vcmask 523264
    %v115 = vsel %vm113, %v88, 0
    %117 = vmatprep.subr.bf16.mxu0 0
    %118 = vmatpush1.bf16.msra.mxu0 %v105
    %119 = vmatprep.subr.bf16.mxu0 0
    %120 = vmatpush1.bf16.msra.mxu0 %v106
    %121 = vmatprep.subr.bf16.mxu0 0
    %122 = vmatpush1.bf16.msra.mxu0 %v107
    %123 = vmatprep.subr.bf16.mxu0 0
    %124 = vmatpush1.bf16.msra.mxu0 %v108
    %125 = vmatprep.subr.bf16.mxu0 0
    %126 = vmatpush1.bf16.msra.mxu0 0
    %127 = vmatprep.subr.bf16.mxu0 0
    %128 = vmatpush1.bf16.msra.mxu0 0
    %129 = vmatprep.subr.bf16.mxu0 0
    %130 = vmatpush1.bf16.msra.mxu0 0
    %131 = vmatprep.subr.bf16.mxu0 0
    %132 = vmatpush1.bf16.msra.mxu0 0
    %133 = vmatprep.subr.bf16.mxu0 0
    %134 = vmatpush1.bf16.msra.mxu0 0
    %135 = vmatprep.subr.bf16.mxu0 0
    %136 = vmatpush1.bf16.msra.mxu0 0
    %137 = vmatprep.subr.bf16.mxu0 0
    %138 = vmatpush1.bf16.msra.mxu0 0
    %139 = vmatprep.subr.bf16.mxu0 0
    %140 = vmatpush1.bf16.msra.mxu0 0
    %141 = vmatprep.subr.bf16.mxu0 0
    %142 = vmatpush1.bf16.msra.mxu0 0
    %143 = vmatprep.subr.bf16.mxu0 0
    %144 = vmatpush1.bf16.msra.mxu0 0
    %145 = vmatprep.subr.bf16.mxu0 0
    %146 = vmatpush1.bf16.msra.mxu0 0
    %147 = vmatprep.subr.bf16.mxu0 0
    %148 = vmatpush1.bf16.msra.mxu0 0
    %149 = vmatprep.mubr.bf16.mxu0 0
    %150 = vmatmul.mubr.bf16.gmra.mrb[0].mxu0 %v115
    %v151 = vpop.f32.mrb[0].mxu0
    %v152 = vadd.f32 0.0, %v151
    %v153 = vpop.f32.mrb[0].mxu0
    %v154 = vpop.f32.mrb[0].mxu0
    %v155 = vpop.f32.mrb[0].mxu0
    %156 = vdwg.mxu0
    %v157 = vmax.f32 %v152, 0.0
    %v158 = vpack.c.bf16 %v157, %v157
    %v159 = vld [vmem:[%s2] sm:$0x3]
    %vm160 = vcmask 31744
    %v162 = vsel %vm160, %v158, 0
    %vm164 = vcmask 1041408
    %v166 = vsel %vm164, %v159, 0
    %168 = vmatprep.subr.bf16.mxu0 0
    %169 = vmatpush1.bf16.msra.mxu0 %v166
    %170 = vmatprep.subr.bf16.mxu0 0
    %171 = vmatpush1.bf16.msra.mxu0 0
    %172 = vmatprep.subr.bf16.mxu0 0
    %173 = vmatpush1.bf16.msra.mxu0 0
    %174 = vmatprep.subr.bf16.mxu0 0
    %175 = vmatpush1.bf16.msra.mxu0 0
    %176 = vmatprep.subr.bf16.mxu0 0
    %177 = vmatpush1.bf16.msra.mxu0 0
    %178 = vmatprep.subr.bf16.mxu0 0
    %179 = vmatpush1.bf16.msra.mxu0 0
    %180 = vmatprep.subr.bf16.mxu0 0
    %181 = vmatpush1.bf16.msra.mxu0 0
    %182 = vmatprep.subr.bf16.mxu0 0
    %183 = vmatpush1.bf16.msra.mxu0 0
    %184 = vmatprep.subr.bf16.mxu0 0
    %185 = vmatpush1.bf16.msra.mxu0 0
    %186 = vmatprep.subr.bf16.mxu0 0
    %187 = vmatpush1.bf16.msra.mxu0 0
    %188 = vmatprep.subr.bf16.mxu0 0
    %189 = vmatpush1.bf16.msra.mxu0 0
    %190 = vmatprep.subr.bf16.mxu0 0
    %191 = vmatpush1.bf16.msra.mxu0 0
    %192 = vmatprep.subr.bf16.mxu0 0
    %193 = vmatpush1.bf16.msra.mxu0 0
    %194 = vmatprep.subr.bf16.mxu0 0
    %195 = vmatpush1.bf16.msra.mxu0 0
    %196 = vmatprep.subr.bf16.mxu0 0
    %197 = vmatpush1.bf16.msra.mxu0 0
    %198 = vmatprep.subr.bf16.mxu0 0
    %199 = vmatpush1.bf16.msra.mxu0 0
    %200 = vmatprep.mubr.bf16.mxu0 0
    %201 = vmatmul.mubr.bf16.gmra.mrb[0].mxu0 %v162
    %v202 = vpop.f32.mrb[0].mxu0
    %v203 = vadd.f32 0.0, %v202
    %v204 = vpop.f32.mrb[0].mxu0
    %v205 = vpop.f32.mrb[0].mxu0
    %v206 = vpop.f32.mrb[0].mxu0
    %207 = vdwg.mxu0
    %v208 = vxor.u32 %v203, 2147483648
    %v209 = vmul.f32 %v208, 1.442695
    %v210 = vpow.pop %v209
    %v211 = vadd.f32 %v210, 1.0
    %v212 = vrcp.pop %v211
    %v213 = vmul.f32 1.0, %v212
    %v215 = vrot.slane %v213, 1
    %v218 = vmul.f32 %v70, %v213
    %v219 = vmul.f32 %v71, %v215
    %v220 = vpack.c.bf16 %v218, %v218
    %v221 = vpack.c.bf16 %v219, %v219
    %v222 = vld [vmem:[%s3] sm:$0xff]
    %v223 = vld [vmem:[%s3 + $0x8] sm:$0xff]
    %v224 = vld [vmem:[%s3 + $0x10] sm:$0xff]
    %v225 = vld [vmem:[%s3 + $0x18] sm:$0xff]
    %v226 = vld [vmem:[%s3 + $0x20] sm:$0xff]
    %v227 = vld [vmem:[%s3 + $0x28] sm:$0xff]
    %v228 = vld [vmem:[%s3 + $0x30] sm:$0xff]
    %v229 = vld [vmem:[%s3 + $0x38] sm:$0xff]
    %v230 = vld [vmem:[%s3 + $0x40] sm:$0xff]
    %v231 = vld [vmem:[%s3 + $0x48] sm:$0xff]
    %v232 = vld [vmem:[%s3 + $0x50] sm:$0xff]
    %v233 = vld [vmem:[%s3 + $0x58] sm:$0xff]
    %v234 = vld [vmem:[%s3 + $0x60] sm:$0xff]
    %v235 = vld [vmem:[%s3 + $0x68] sm:$0xff]
    %v236 = vld [vmem:[%s3 + $0x70] sm:$0xff]
    %v237 = vld [vmem:[%s3 + $0x78] sm:$0xff]
    %v238 = vld [vmem:[%s4] sm:$0xf]
    %v240 = vlaneseq
    %v241 = vshrl.u32 %v240, 7
    %v242 = vsub.s32 0, %v241
    %v243 = vrot.slane %v238, %v242
    %v244 = vlaneseq
    %v245 = vshrl.u32 %v244, 7
    %v246 = vsub.s32 1, %v245
    %v247 = vrot.slane %v238, %v246
    %v248 = vlaneseq
    %v249 = vshrl.u32 %v248, 7
    %v250 = vsub.s32 2, %v249
    %v251 = vrot.slane %v238, %v250
    %v252 = vlaneseq
    %v253 = vshrl.u32 %v252, 7
    %v254 = vsub.s32 3, %v253
    %v255 = vrot.slane %v238, %v254
    %v262 = vunpack.c.l.b16 %v220
    %v263 = vunpack.c.l.b16 %v221
    %v264 = vrot.slane %v263, 7
    %v265 = vsel %vm86, %v264, %v262
    %v266 = vpack.c.b16 %v265, %v265
    %v283 = vunpack.c.l.b16 %v222
    %v284 = vunpack.c.h.b16 %v222
    %v285 = vunpack.c.l.b16 %v223
    %v286 = vunpack.c.h.b16 %v223
    %v287 = vunpack.c.l.b16 %v224
    %v288 = vunpack.c.h.b16 %v224
    %v289 = vunpack.c.l.b16 %v225
    %v290 = vunpack.c.h.b16 %v225
    %v291 = vunpack.c.l.b16 %v226
    %v292 = vunpack.c.h.b16 %v226
    %v293 = vunpack.c.l.b16 %v227
    %v294 = vunpack.c.h.b16 %v227
    %v295 = vunpack.c.l.b16 %v228
    %v296 = vunpack.c.h.b16 %v228
    %v297 = vunpack.c.l.b16 %v229
    %v298 = vunpack.c.h.b16 %v229
    %v299 = vunpack.c.l.b16 %v230
    %v300 = vunpack.c.h.b16 %v230
    %v301 = vunpack.c.l.b16 %v231
    %v302 = vunpack.c.h.b16 %v231
    %v303 = vunpack.c.l.b16 %v232
    %v304 = vunpack.c.h.b16 %v232
    %v305 = vunpack.c.l.b16 %v233
    %v306 = vunpack.c.h.b16 %v233
    %v307 = vunpack.c.l.b16 %v234
    %v308 = vunpack.c.h.b16 %v234
    %v309 = vunpack.c.l.b16 %v235
    %v310 = vunpack.c.h.b16 %v235
    %v311 = vunpack.c.l.b16 %v236
    %v312 = vunpack.c.h.b16 %v236
    %v313 = vunpack.c.l.b16 %v237
    %v314 = vunpack.c.h.b16 %v237
    %v315 = vpack.c.b16 %v287, %v283
    %v316 = vpack.c.b16 %v288, %v284
    %v317 = vpack.c.b16 %v289, %v285
    %v318 = vpack.c.b16 %v290, %v286
    %v319 = vpack.c.b16 %v295, %v291
    %v320 = vpack.c.b16 %v296, %v292
    %v321 = vpack.c.b16 %v297, %v293
    %v322 = vpack.c.b16 %v298, %v294
    %v323 = vpack.c.b16 %v303, %v299
    %v324 = vpack.c.b16 %v304, %v300
    %v325 = vpack.c.b16 %v305, %v301
    %v326 = vpack.c.b16 %v306, %v302
    %v327 = vpack.c.b16 %v311, %v307
    %v328 = vpack.c.b16 %v312, %v308
    %v329 = vpack.c.b16 %v313, %v309
    %v330 = vpack.c.b16 %v314, %v310
    %v348 = vsel %vm113, %v266, 0
    %350 = vmatprep.subr.bf16.mxu0 %v316
    %351 = vmatpush1.bf16.msra.mxu0 %v315
    %352 = vmatprep.subr.bf16.mxu0 %v320
    %353 = vmatpush1.bf16.msra.mxu0 %v319
    %354 = vmatprep.subr.bf16.mxu0 %v324
    %355 = vmatpush1.bf16.msra.mxu0 %v323
    %356 = vmatprep.subr.bf16.mxu0 %v328
    %357 = vmatpush1.bf16.msra.mxu0 %v327
    %358 = vmatprep.subr.bf16.mxu0 0
    %359 = vmatpush1.bf16.msra.mxu0 0
    %360 = vmatprep.subr.bf16.mxu0 0
    %361 = vmatpush1.bf16.msra.mxu0 0
    %362 = vmatprep.subr.bf16.mxu0 0
    %363 = vmatpush1.bf16.msra.mxu0 0
    %364 = vmatprep.subr.bf16.mxu0 0
    %365 = vmatpush1.bf16.msra.mxu0 0
    %366 = vmatprep.subr.bf16.mxu0 0
    %367 = vmatpush1.bf16.msra.mxu0 0
    %368 = vmatprep.subr.bf16.mxu0 0
    %369 = vmatpush1.bf16.msra.mxu0 0
    %370 = vmatprep.subr.bf16.mxu0 0
    %371 = vmatpush1.bf16.msra.mxu0 0
    %372 = vmatprep.subr.bf16.mxu0 0
    %373 = vmatpush1.bf16.msra.mxu0 0
    %374 = vmatprep.subr.bf16.mxu0 0
    %375 = vmatpush1.bf16.msra.mxu0 0
    %376 = vmatprep.subr.bf16.mxu0 0
    %377 = vmatpush1.bf16.msra.mxu0 0
    %378 = vmatprep.subr.bf16.mxu0 0
    %379 = vmatpush1.bf16.msra.mxu0 0
    %380 = vmatprep.subr.bf16.mxu0 0
    %381 = vmatpush1.bf16.msra.mxu0 0
    %382 = vmatprep.mubr.bf16.mxu0 0
    %383 = vmatmul.mubr.bf16.gmra.mrb[0].mxu0 %v348
    %v384 = vpop.f32.mrb[0].mxu0
    %v385 = vadd.f32 %v243, %v384
    %v386 = vpop.f32.mrb[0].mxu0
    %v387 = vadd.f32 %v247, %v386
    %v388 = vpop.f32.mrb[0].mxu0
    %v389 = vpop.f32.mrb[0].mxu0
    %390 = vdwg.mxu0
    %391 = vmatprep.subr.bf16.mxu0 %v318
    %392 = vmatpush1.bf16.msra.mxu0 %v317
    %393 = vmatprep.subr.bf16.mxu0 %v322
    %394 = vmatpush1.bf16.msra.mxu0 %v321
    %395 = vmatprep.subr.bf16.mxu0 %v326
    %396 = vmatpush1.bf16.msra.mxu0 %v325
    %397 = vmatprep.subr.bf16.mxu0 %v330
    %398 = vmatpush1.bf16.msra.mxu0 %v329
    %399 = vmatprep.subr.bf16.mxu0 0
    %400 = vmatpush1.bf16.msra.mxu0 0
    %401 = vmatprep.subr.bf16.mxu0 0
    %402 = vmatpush1.bf16.msra.mxu0 0
    %403 = vmatprep.subr.bf16.mxu0 0
    %404 = vmatpush1.bf16.msra.mxu0 0
    %405 = vmatprep.subr.bf16.mxu0 0
    %406 = vmatpush1.bf16.msra.mxu0 0
    %407 = vmatprep.subr.bf16.mxu0 0
    %408 = vmatpush1.bf16.msra.mxu0 0
    %409 = vmatprep.subr.bf16.mxu0 0
    %410 = vmatpush1.bf16.msra.mxu0 0
    %411 = vmatprep.subr.bf16.mxu0 0
    %412 = vmatpush1.bf16.msra.mxu0 0
    %413 = vmatprep.subr.bf16.mxu0 0
    %414 = vmatpush1.bf16.msra.mxu0 0
    %415 = vmatprep.subr.bf16.mxu0 0
    %416 = vmatpush1.bf16.msra.mxu0 0
    %417 = vmatprep.subr.bf16.mxu0 0
    %418 = vmatpush1.bf16.msra.mxu0 0
    %419 = vmatprep.subr.bf16.mxu0 0
    %420 = vmatpush1.bf16.msra.mxu0 0
    %421 = vmatprep.subr.bf16.mxu0 0
    %422 = vmatpush1.bf16.msra.mxu0 0
    %423 = vmatprep.mubr.bf16.mxu0 0
    %424 = vmatmul.mubr.bf16.gmra.mrb[0].mxu0 %v348
    %v425 = vpop.f32.mrb[0].mxu0
    %v426 = vadd.f32 %v251, %v425
    %v427 = vpop.f32.mrb[0].mxu0
    %v428 = vadd.f32 %v255, %v427
    %v429 = vpop.f32.mrb[0].mxu0
    %v430 = vpop.f32.mrb[0].mxu0
    %431 = vdwg.mxu0
    %v432 = vmax.f32 %v385, 0.0
    %v433 = vmax.f32 %v387, 0.0
    %v434 = vmax.f32 %v426, 0.0
    %v435 = vmax.f32 %v428, 0.0
    %v436 = vpack.c.bf16 %v432, %v432
    %v437 = vpack.c.bf16 %v433, %v433
    %v438 = vpack.c.bf16 %v434, %v434
    %v439 = vpack.c.bf16 %v435, %v435
    %v440 = vld [vmem:[%s5] sm:$0xf]
    %v441 = vld [vmem:[%s5 + $0x4] sm:$0xf]
    %v442 = vld [vmem:[%s5 + $0x8] sm:$0xf]
    %v443 = vld [vmem:[%s5 + $0xc] sm:$0xf]
    %v444 = vld [vmem:[%s5 + $0x10] sm:$0xf]
    %v445 = vld [vmem:[%s5 + $0x14] sm:$0xf]
    %v446 = vld [vmem:[%s5 + $0x18] sm:$0xf]
    %v447 = vld [vmem:[%s5 + $0x1c] sm:$0xf]
    %v448 = vld [vmem:[%s5 + $0x20] sm:$0xf]
    %v449 = vld [vmem:[%s5 + $0x24] sm:$0xf]
    %v450 = vld [vmem:[%s5 + $0x28] sm:$0xf]
    %v451 = vld [vmem:[%s5 + $0x2c] sm:$0xf]
    %v452 = vld [vmem:[%s5 + $0x30] sm:$0xf]
    %v453 = vld [vmem:[%s5 + $0x34] sm:$0xf]
    %v454 = vld [vmem:[%s5 + $0x38] sm:$0xf]
    %v455 = vld [vmem:[%s5 + $0x3c] sm:$0xf]
    %v456 = vld [vmem:[%s5 + $0x40] sm:$0xf]
    %v457 = vld [vmem:[%s5 + $0x44] sm:$0xf]
    %v458 = vld [vmem:[%s5 + $0x48] sm:$0xf]
    %v459 = vld [vmem:[%s5 + $0x4c] sm:$0xf]
    %v460 = vld [vmem:[%s5 + $0x50] sm:$0xf]
    %v461 = vld [vmem:[%s5 + $0x54] sm:$0xf]
    %v462 = vld [vmem:[%s5 + $0x58] sm:$0xf]
    %v463 = vld [vmem:[%s5 + $0x5c] sm:$0xf]
    %v464 = vld [vmem:[%s5 + $0x60] sm:$0xf]
    %v465 = vld [vmem:[%s5 + $0x64] sm:$0xf]
    %v466 = vld [vmem:[%s5 + $0x68] sm:$0xf]
    %v467 = vld [vmem:[%s5 + $0x6c] sm:$0xf]
    %v468 = vld [vmem:[%s5 + $0x70] sm:$0xf]
    %v469 = vld [vmem:[%s5 + $0x74] sm:$0xf]
    %v470 = vld [vmem:[%s5 + $0x78] sm:$0xf]
    %v471 = vld [vmem:[%s5 + $0x7c] sm:$0xf]
    %v472 = vld [vmem:[%s5 + $0x80] sm:$0xf]
    %v473 = vld [vmem:[%s5 + $0x84] sm:$0xf]
    %v474 = vld [vmem:[%s5 + $0x88] sm:$0xf]
    %v475 = vld [vmem:[%s5 + $0x8c] sm:$0xf]
    %v476 = vld [vmem:[%s5 + $0x90] sm:$0xf]
    %v477 = vld [vmem:[%s5 + $0x94] sm:$0xf]
    %v478 = vld [vmem:[%s5 + $0x98] sm:$0xf]
    %v479 = vld [vmem:[%s5 + $0x9c] sm:$0xf]
    %v480 = vld [vmem:[%s5 + $0xa0] sm:$0xf]
    %v481 = vld [vmem:[%s5 + $0xa4] sm:$0xf]
    %v482 = vld [vmem:[%s5 + $0xa8] sm:$0xf]
    %v483 = vld [vmem:[%s5 + $0xac] sm:$0xf]
    %v484 = vld [vmem:[%s5 + $0xb0] sm:$0xf]
    %v485 = vld [vmem:[%s5 + $0xb4] sm:$0xf]
    %v486 = vld [vmem:[%s5 + $0xb8] sm:$0xf]
    %v487 = vld [vmem:[%s5 + $0xbc] sm:$0xf]
    %v488 = vld [vmem:[%s5 + $0xc0] sm:$0xf]
    %v489 = vld [vmem:[%s5 + $0xc4] sm:$0xf]
    %v490 = vld [vmem:[%s5 + $0xc8] sm:$0xf]
    %v491 = vld [vmem:[%s5 + $0xcc] sm:$0xf]
    %v492 = vld [vmem:[%s5 + $0xd0] sm:$0xf]
    %v493 = vld [vmem:[%s5 + $0xd4] sm:$0xf]
    %v494 = vld [vmem:[%s5 + $0xd8] sm:$0xf]
    %v495 = vld [vmem:[%s5 + $0xdc] sm:$0xf]
    %v496 = vld [vmem:[%s5 + $0xe0] sm:$0xf]
    %v497 = vld [vmem:[%s5 + $0xe4] sm:$0xf]
    %v498 = vld [vmem:[%s5 + $0xe8] sm:$0xf]
    %v499 = vld [vmem:[%s5 + $0xec] sm:$0xf]
    %v500 = vld [vmem:[%s5 + $0xf0] sm:$0xf]
    %v501 = vld [vmem:[%s5 + $0xf4] sm:$0xf]
    %v502 = vld [vmem:[%s5 + $0xf8] sm:$0xf]
    %v503 = vld [vmem:[%s5 + $0xfc] sm:$0xf]
    %v504 = vld [vmem:[%s6] sm:$0x1]
    %v506 = vlaneseq
    %v507 = vshrl.u32 %v506, 7
    %v508 = vsub.s32 0, %v507
    %v509 = vrot.slane %v504, %v508
    %v575 = vunpack.c.l.b16 %v440
    %v576 = vunpack.c.l.b16 %v441
    %v577 = vunpack.c.l.b16 %v442
    %v578 = vunpack.c.l.b16 %v443
    %v579 = vunpack.c.l.b16 %v444
    %v580 = vunpack.c.l.b16 %v445
    %v581 = vunpack.c.l.b16 %v446
    %v582 = vunpack.c.l.b16 %v447
    %v583 = vunpack.c.l.b16 %v448
    %v584 = vunpack.c.l.b16 %v449
    %v585 = vunpack.c.l.b16 %v450
    %v586 = vunpack.c.l.b16 %v451
    %v587 = vunpack.c.l.b16 %v452
    %v588 = vunpack.c.l.b16 %v453
    %v589 = vunpack.c.l.b16 %v454
    %v590 = vunpack.c.l.b16 %v455
    %v591 = vunpack.c.l.b16 %v456
    %v592 = vunpack.c.l.b16 %v457
    %v593 = vunpack.c.l.b16 %v458
    %v594 = vunpack.c.l.b16 %v459
    %v595 = vunpack.c.l.b16 %v460
    %v596 = vunpack.c.l.b16 %v461
    %v597 = vunpack.c.l.b16 %v462
    %v598 = vunpack.c.l.b16 %v463
    %v599 = vunpack.c.l.b16 %v464
    %v600 = vunpack.c.l.b16 %v465
    %v601 = vunpack.c.l.b16 %v466
    %v602 = vunpack.c.l.b16 %v467
    %v603 = vunpack.c.l.b16 %v468
    %v604 = vunpack.c.l.b16 %v469
    %v605 = vunpack.c.l.b16 %v470
    %v606 = vunpack.c.l.b16 %v471
    %v607 = vunpack.c.l.b16 %v472
    %v608 = vunpack.c.l.b16 %v473
    %v609 = vunpack.c.l.b16 %v474
    %v610 = vunpack.c.l.b16 %v475
    %v611 = vunpack.c.l.b16 %v476
    %v612 = vunpack.c.l.b16 %v477
    %v613 = vunpack.c.l.b16 %v478
    %v614 = vunpack.c.l.b16 %v479
    %v615 = vunpack.c.l.b16 %v480
    %v616 = vunpack.c.l.b16 %v481
    %v617 = vunpack.c.l.b16 %v482
    %v618 = vunpack.c.l.b16 %v483
    %v619 = vunpack.c.l.b16 %v484
    %v620 = vunpack.c.l.b16 %v485
    %v621 = vunpack.c.l.b16 %v486
    %v622 = vunpack.c.l.b16 %v487
    %v623 = vunpack.c.l.b16 %v488
    %v624 = vunpack.c.l.b16 %v489
    %v625 = vunpack.c.l.b16 %v490
    %v626 = vunpack.c.l.b16 %v491
    %v627 = vunpack.c.l.b16 %v492
    %v628 = vunpack.c.l.b16 %v493
    %v629 = vunpack.c.l.b16 %v494
    %v630 = vunpack.c.l.b16 %v495
    %v631 = vunpack.c.l.b16 %v496
    %v632 = vunpack.c.l.b16 %v497
    %v633 = vunpack.c.l.b16 %v498
    %v634 = vunpack.c.l.b16 %v499
    %v635 = vunpack.c.l.b16 %v500
    %v636 = vunpack.c.l.b16 %v501
    %v637 = vunpack.c.l.b16 %v502
    %v638 = vunpack.c.l.b16 %v503
    %v639 = vpack.c.b16 %v576, %v575
    %v640 = vpack.c.b16 %v578, %v577
    %v641 = vpack.c.b16 %v580, %v579
    %v642 = vpack.c.b16 %v582, %v581
    %v643 = vpack.c.b16 %v584, %v583
    %v644 = vpack.c.b16 %v586, %v585
    %v645 = vpack.c.b16 %v588, %v587
    %v646 = vpack.c.b16 %v590, %v589
    %v647 = vpack.c.b16 %v592, %v591
    %v648 = vpack.c.b16 %v594, %v593
    %v649 = vpack.c.b16 %v596, %v595
    %v650 = vpack.c.b16 %v598, %v597
    %v651 = vpack.c.b16 %v600, %v599
    %v652 = vpack.c.b16 %v602, %v601
    %v653 = vpack.c.b16 %v604, %v603
    %v654 = vpack.c.b16 %v606, %v605
    %v655 = vpack.c.b16 %v608, %v607
    %v656 = vpack.c.b16 %v610, %v609
    %v657 = vpack.c.b16 %v612, %v611
    %v658 = vpack.c.b16 %v614, %v613
    %v659 = vpack.c.b16 %v616, %v615
    %v660 = vpack.c.b16 %v618, %v617
    %v661 = vpack.c.b16 %v620, %v619
    %v662 = vpack.c.b16 %v622, %v621
    %v663 = vpack.c.b16 %v624, %v623
    %v664 = vpack.c.b16 %v626, %v625
    %v665 = vpack.c.b16 %v628, %v627
    %v666 = vpack.c.b16 %v630, %v629
    %v667 = vpack.c.b16 %v632, %v631
    %v668 = vpack.c.b16 %v634, %v633
    %v669 = vpack.c.b16 %v636, %v635
    %v670 = vpack.c.b16 %v638, %v637
    %703 = vmatprep.subr.bf16.mxu0 0
    %704 = vmatpush1.bf16.msra.mxu0 %v639
    %705 = vmatprep.subr.bf16.mxu0 0
    %706 = vmatpush1.bf16.msra.mxu0 %v640
    %707 = vmatprep.subr.bf16.mxu0 0
    %708 = vmatpush1.bf16.msra.mxu0 %v641
    %709 = vmatprep.subr.bf16.mxu0 0
    %710 = vmatpush1.bf16.msra.mxu0 %v642
    %711 = vmatprep.subr.bf16.mxu0 0
    %712 = vmatpush1.bf16.msra.mxu0 %v643
    %713 = vmatprep.subr.bf16.mxu0 0
    %714 = vmatpush1.bf16.msra.mxu0 %v644
    %715 = vmatprep.subr.bf16.mxu0 0
    %716 = vmatpush1.bf16.msra.mxu0 %v645
    %717 = vmatprep.subr.bf16.mxu0 0
    %718 = vmatpush1.bf16.msra.mxu0 %v646
    %719 = vmatprep.subr.bf16.mxu0 0
    %720 = vmatpush1.bf16.msra.mxu0 %v647
    %721 = vmatprep.subr.bf16.mxu0 0
    %722 = vmatpush1.bf16.msra.mxu0 %v648
    %723 = vmatprep.subr.bf16.mxu0 0
    %724 = vmatpush1.bf16.msra.mxu0 %v649
    %725 = vmatprep.subr.bf16.mxu0 0
    %726 = vmatpush1.bf16.msra.mxu0 %v650
    %727 = vmatprep.subr.bf16.mxu0 0
    %728 = vmatpush1.bf16.msra.mxu0 %v651
    %729 = vmatprep.subr.bf16.mxu0 0
    %730 = vmatpush1.bf16.msra.mxu0 %v652
    %731 = vmatprep.subr.bf16.mxu0 0
    %732 = vmatpush1.bf16.msra.mxu0 %v653
    %733 = vmatprep.subr.bf16.mxu0 0
    %734 = vmatpush1.bf16.msra.mxu0 %v654
    %735 = vmatprep.mubr.bf16.mxu0 %v437
    %736 = vmatmul.mubr.bf16.gmra.mrb[0].mxu0 %v436
    %v737 = vpop.f32.mrb[0].mxu0
    %v738 = vadd.f32 %v509, %v737
    %v739 = vpop.f32.mrb[0].mxu0
    %v740 = vpop.f32.mrb[0].mxu0
    %v741 = vpop.f32.mrb[0].mxu0
    %742 = vdwg.mxu0
    %743 = vmatprep.subr.bf16.mxu0 0
    %744 = vmatpush1.bf16.msra.mxu0 %v655
    %745 = vmatprep.subr.bf16.mxu0 0
    %746 = vmatpush1.bf16.msra.mxu0 %v656
    %747 = vmatprep.subr.bf16.mxu0 0
    %748 = vmatpush1.bf16.msra.mxu0 %v657
    %749 = vmatprep.subr.bf16.mxu0 0
    %750 = vmatpush1.bf16.msra.mxu0 %v658
    %751 = vmatprep.subr.bf16.mxu0 0
    %752 = vmatpush1.bf16.msra.mxu0 %v659
    %753 = vmatprep.subr.bf16.mxu0 0
    %754 = vmatpush1.bf16.msra.mxu0 %v660
    %755 = vmatprep.subr.bf16.mxu0 0
    %756 = vmatpush1.bf16.msra.mxu0 %v661
    %757 = vmatprep.subr.bf16.mxu0 0
    %758 = vmatpush1.bf16.msra.mxu0 %v662
    %759 = vmatprep.subr.bf16.mxu0 0
    %760 = vmatpush1.bf16.msra.mxu0 %v663
    %761 = vmatprep.subr.bf16.mxu0 0
    %762 = vmatpush1.bf16.msra.mxu0 %v664
    %763 = vmatprep.subr.bf16.mxu0 0
    %764 = vmatpush1.bf16.msra.mxu0 %v665
    %765 = vmatprep.subr.bf16.mxu0 0
    %766 = vmatpush1.bf16.msra.mxu0 %v666
    %767 = vmatprep.subr.bf16.mxu0 0
    %768 = vmatpush1.bf16.msra.mxu0 %v667
    %769 = vmatprep.subr.bf16.mxu0 0
    %770 = vmatpush1.bf16.msra.mxu0 %v668
    %771 = vmatprep.subr.bf16.mxu0 0
    %772 = vmatpush1.bf16.msra.mxu0 %v669
    %773 = vmatprep.subr.bf16.mxu0 0
    %774 = vmatpush1.bf16.msra.mxu0 %v670
    %775 = vmatprep.mubr.bf16.mxu0 %v439
    %776 = vmatmul.mubr.bf16.gmra.mrb[0].mxu0 %v438
    %v777 = vpop.f32.mrb[0].mxu0
    %v778 = vadd.f32 %v738, %v777
    %v779 = vpop.f32.mrb[0].mxu0
    %v780 = vpop.f32.mrb[0].mxu0
    %v781 = vpop.f32.mrb[0].mxu0
    %782 = vdwg.mxu0
    %783 = vst [vmem:[#allocation2] sm:$0x3] %v778
    // Predicated region
    $region37: #{tpu_custom_call.1} parent=1 // pred_check
      _
    $region38: #{tpu_custom_call.1} parent=1 // pred_check_branch
      %785 = sbr.rel (0) target = $region40
    $region39: #{tpu_custom_call.1} parent=1 // pred_region
      %s787 = ssub.s32 32, 32
      %788 = vsyncadd [#allocation3], %s787
      %s790 = sshll.u32 [#allocation2], 4
      %s791 = int_to_ptr.vmem [resolvable:$true] %s790
      %793 = dma.vmem_to_hbm [thread:$0]  %s791, 32, %s7, [#allocation3]
    $region40: #{tpu_custom_call.1} parent=1 // pred_fallthru
      _
    // Predicated region
    $region41: #{tpu_custom_call.1} parent=1 // pred_check
      _
    $region42: #{tpu_custom_call.1} parent=1 // pred_check_branch
      %795 = sbr.rel (0) target = $region44
    $region43: #{tpu_custom_call.1} parent=1 // pred_region
      %796 = dma.done [#allocation3], 32
    $region44: #{tpu_custom_call.1} parent=1 // pred_fallthru
      _
    %797 = vsyncpa [#allocation3], 1

// kernel: tpu_custom_call.1
$region0: #{tpu_custom_call.1}
  #allocation0 [shape = 'u32[]', space=smem, size = 0x4, offset = 0x4, fixed_abs, tag = 'smem constant byte address 0x4 - core index']
  #allocation1 [shape = 'u32[144,128]{1,0:T(1,128)}', space=vmem, size = 0x12000, scoped, tag = 'internal scratch']
  %s0 = inlined_call_operand.vmem [shape: bf16[2,256,64], index: 0, kind: input, shape index: {}]
  %s1 = inlined_call_operand.vmem [shape: bf16[64,4], index: 1, kind: input, shape index: {}]
  %s2 = inlined_call_operand.vmem [shape: bf16[4,64], index: 2, kind: input, shape index: {}]
  %s3 = inlined_call_operand.vmem [shape: bf16[64,512], index: 3, kind: input, shape index: {}]
  %s4 = inlined_call_operand.vmem [shape: f32[1,512], index: 4, kind: input, shape index: {}]
  %s5 = inlined_call_operand.vmem [shape: bf16[512,128], index: 5, kind: input, shape index: {}]
  %s6 = inlined_call_operand.vmem [shape: f32[1,128], index: 6, kind: input, shape index: {}]
  %s7 = inlined_call_operand.hbm [shape: f32[2,128], index: 7, kind: output, shape index: {}]
  %s8 = sld [smem:[#allocation0]]
  $region45: #{tpu_custom_call.1} parent=0
    _
  %s10 = ssub.s32 1, %s8
  %s11 = scalar_select 0, %s10, %s8
  $region1: #{tpu_custom_call.1} parent=0
    #allocation2 [shape = 'u8[1024]{0}', space=vmem, size = 0x400, scoped, tag = 'output window, operand 0, single buffered']
    #allocation3 [shape = 's32[1]{0}', space=sflag, size = 0x4, scoped, tag = 'scoped memory for tpu_custom_call.1']
    %12 = vsyncpa [#allocation3], 0
    // Predicated region
    $region2: #{tpu_custom_call.1} parent=1 // pred_check
      _
    $region3: #{tpu_custom_call.1} parent=1 // pred_check_branch
      %14 = sbr.rel (0) target = $region5
    $region4: #{tpu_custom_call.1} parent=1 // pred_region
      _
    $region5: #{tpu_custom_call.1} parent=1 // pred_fallthru
      _
    // Predicated region
    $region6: #{tpu_custom_call.1} parent=1 // pred_check
      _
    $region7: #{tpu_custom_call.1} parent=1 // pred_check_branch
      %16 = sbr.rel (0) target = $region9
    $region8: #{tpu_custom_call.1} parent=1 // pred_region
      _
    $region9: #{tpu_custom_call.1} parent=1 // pred_fallthru
      _
    // Predicated region
    $region10: #{tpu_custom_call.1} parent=1 // pred_check
      _
    $region11: #{tpu_custom_call.1} parent=1 // pred_check_branch
      %18 = sbr.rel (0) target = $region13
    $region12: #{tpu_custom_call.1} parent=1 // pred_region
      _
    $region13: #{tpu_custom_call.1} parent=1 // pred_fallthru
      _
    // Predicated region
    $region14: #{tpu_custom_call.1} parent=1 // pred_check
      _
    $region15: #{tpu_custom_call.1} parent=1 // pred_check_branch
      %20 = sbr.rel (0) target = $region17
    $region16: #{tpu_custom_call.1} parent=1 // pred_region
      _
    $region17: #{tpu_custom_call.1} parent=1 // pred_fallthru
      _
    // Predicated region
    $region18: #{tpu_custom_call.1} parent=1 // pred_check
      _
    $region19: #{tpu_custom_call.1} parent=1 // pred_check_branch
      %22 = sbr.rel (0) target = $region21
    $region20: #{tpu_custom_call.1} parent=1 // pred_region
      _
    $region21: #{tpu_custom_call.1} parent=1 // pred_fallthru
      _
    // Predicated region
    $region22: #{tpu_custom_call.1} parent=1 // pred_check
      _
    $region23: #{tpu_custom_call.1} parent=1 // pred_check_branch
      %24 = sbr.rel (0) target = $region25
    $region24: #{tpu_custom_call.1} parent=1 // pred_region
      _
    $region25: #{tpu_custom_call.1} parent=1 // pred_fallthru
      _
    // Predicated region
    $region26: #{tpu_custom_call.1} parent=1 // pred_check
      _
    $region27: #{tpu_custom_call.1} parent=1 // pred_check_branch
      %26 = sbr.rel (0) target = $region29
    $region28: #{tpu_custom_call.1} parent=1 // pred_region
      _
    $region29: #{tpu_custom_call.1} parent=1 // pred_fallthru
      _
    loop: start=0, step=1, limit=16
    $region30: #{tpu_custom_call.1} parent=1 // loop_pre_header
      _
    $region31: #{tpu_custom_call.1} parent=1 // loop_header
      %s29 = sphi 0, %s33
      %p30 = scmp.ge.s32.totalorder %s29, 16
      %v34 = vphi 0.0, %v68
      %v35 = vphi 0.0, %v69
    $region32: #{tpu_custom_call.1} parent=1 // loop_header_branch
      %32 = sbr.rel (%p30) target = $region36
    $region33: #{tpu_custom_call.1} parent=1 // loop_body
      %s36 = smul.u32 %s29, 16
      %s37 = sshra.s32 %s36, 3
      %s38 = sand.u32 %s36, 7
      %s39 = smul.addr %s37, 4
      %s40 = scalar_lea.vmem %s0, %s39
      %v41 = vld [vmem:[%s40] sm:$0xf]
      %v42 = vld [vmem:[%s40 + $0x4] sm:$0xf]
      %v43 = vld [vmem:[%s40 + $0x80] sm:$0xf]
      %v44 = vld [vmem:[%s40 + $0x84] sm:$0xf]
      %v45 = vunpack.c.l.bf16 %v41
      %v46 = vunpack.c.l.bf16 %v42
      %v47 = vunpack.c.l.bf16 %v43
      %v48 = vunpack.c.l.bf16 %v44
      %vm49 = vcmask 523264
      %v50 = vsel %vm49, %v45, 0.0
      %v51 = vsel %vm49, %v46, 0.0
      %v52 = vadd.f32 %v50, %v51
      %v53 = vrot.slane %v52, 4
      %v54 = vadd.f32 %v52, %v53
      %v55 = vrot.slane %v54, 2
      %v56 = vadd.f32 %v54, %v55
      %v57 = vrot.slane %v56, 1
      %v58 = vadd.f32 %v56, %v57
      %v59 = vsel %vm49, %v47, 0.0
      %v60 = vsel %vm49, %v48, 0.0
      %v61 = vadd.f32 %v59, %v60
      %v62 = vrot.slane %v61, 4
      %v63 = vadd.f32 %v61, %v62
      %v64 = vrot.slane %v63, 2
      %v65 = vadd.f32 %v63, %v64
      %v66 = vrot.slane %v65, 1
      %v67 = vadd.f32 %v65, %v66
      %v68 = vadd.f32 %v34, %v58
      %v69 = vadd.f32 %v35, %v67
    $region34: #{tpu_custom_call.1} parent=1 // loop_footer
      %s33 = sadd.s32 1, %s29
    $region35: #{tpu_custom_call.1} parent=1 // loop_footer_branch
      %28 = sbr.rel target = $region31
    $region36: #{tpu_custom_call.1} parent=1 // loop_exit
      _
    %v70 = vmul.f32 %v34, 0.00390625
    %v71 = vmul.f32 %v35, 0.00390625
    %v72 = vpack.c.bf16 %v70, %v70
    %v73 = vpack.c.bf16 %v71, %v71
    %v74 = vld [vmem:[%s1] sm:$0xf]
    %v75 = vld [vmem:[%s1 + $0x4] sm:$0xf]
    %v76 = vld [vmem:[%s1 + $0x8] sm:$0xf]
    %v77 = vld [vmem:[%s1 + $0xc] sm:$0xf]
    %v78 = vld [vmem:[%s1 + $0x10] sm:$0xf]
    %v79 = vld [vmem:[%s1 + $0x14] sm:$0xf]
    %v80 = vld [vmem:[%s1 + $0x18] sm:$0xf]
    %v81 = vld [vmem:[%s1 + $0x1c] sm:$0xf]
    %v84 = vunpack.c.l.b16 %v72
    %v85 = vunpack.c.l.b16 %v73
    %vm86 = vcmask 1041409
    %v87 = vsel %vm86, %v85, %v84
    %v88 = vpack.c.b16 %v87, %v87
    %v97 = vunpack.c.l.b16 %v74
    %v98 = vunpack.c.l.b16 %v75
    %v99 = vunpack.c.l.b16 %v76
    %v100 = vunpack.c.l.b16 %v77
    %v101 = vunpack.c.l.b16 %v78
    %v102 = vunpack.c.l.b16 %v79
    %v103 = vunpack.c.l.b16 %v80
    %v104 = vunpack.c.l.b16 %v81
    %v105 = vpack.c.b16 %v98, %v97
    %v106 = vpack.c.b16 %v100, %v99
    %v107 = vpack.c.b16 %v102, %v101
    %v108 = vpack.c.b16 %v104, %v103
    %vm113 = vcmask 523264
    %v115 = vsel %vm113, %v88, 0
    %117 = vmatprep.subr.bf16.mxu0 0
    %118 = vmatpush1.bf16.msra.mxu0 %v105
    %119 = vmatprep.subr.bf16.mxu0 0
    %120 = vmatpush1.bf16.msra.mxu0 %v106
    %121 = vmatprep.subr.bf16.mxu0 0
    %122 = vmatpush1.bf16.msra.mxu0 %v107
    %123 = vmatprep.subr.bf16.mxu0 0
    %124 = vmatpush1.bf16.msra.mxu0 %v108
    %125 = vmatprep.subr.bf16.mxu0 0
    %126 = vmatpush1.bf16.msra.mxu0 0
    %127 = vmatprep.subr.bf16.mxu0 0
    %128 = vmatpush1.bf16.msra.mxu0 0
    %129 = vmatprep.subr.bf16.mxu0 0
    %130 = vmatpush1.bf16.msra.mxu0 0
    %131 = vmatprep.subr.bf16.mxu0 0
    %132 = vmatpush1.bf16.msra.mxu0 0
    %133 = vmatprep.subr.bf16.mxu0 0
    %134 = vmatpush1.bf16.msra.mxu0 0
    %135 = vmatprep.subr.bf16.mxu0 0
    %136 = vmatpush1.bf16.msra.mxu0 0
    %137 = vmatprep.subr.bf16.mxu0 0
    %138 = vmatpush1.bf16.msra.mxu0 0
    %139 = vmatprep.subr.bf16.mxu0 0
    %140 = vmatpush1.bf16.msra.mxu0 0
    %141 = vmatprep.subr.bf16.mxu0 0
    %142 = vmatpush1.bf16.msra.mxu0 0
    %143 = vmatprep.subr.bf16.mxu0 0
    %144 = vmatpush1.bf16.msra.mxu0 0
    %145 = vmatprep.subr.bf16.mxu0 0
    %146 = vmatpush1.bf16.msra.mxu0 0
    %147 = vmatprep.subr.bf16.mxu0 0
    %148 = vmatpush1.bf16.msra.mxu0 0
    %149 = vmatprep.mubr.bf16.mxu0 0
    %150 = vmatmul.mubr.bf16.gmra.mrb[0].mxu0 %v115
    %v151 = vpop.f32.mrb[0].mxu0
    %v152 = vadd.f32 0.0, %v151
    %v153 = vpop.f32.mrb[0].mxu0
    %v154 = vpop.f32.mrb[0].mxu0
    %v155 = vpop.f32.mrb[0].mxu0
    %156 = vdwg.mxu0
    %v157 = vmax.f32 %v152, 0.0
    %v158 = vpack.c.bf16 %v157, %v157
    %v159 = vld [vmem:[%s2] sm:$0x3]
    %vm160 = vcmask 31744
    %v162 = vsel %vm160, %v158, 0
    %vm164 = vcmask 1041408
    %v166 = vsel %vm164, %v159, 0
    %168 = vmatprep.subr.bf16.mxu0 0
    %169 = vmatpush1.bf16.msra.mxu0 %v166
    %170 = vmatprep.subr.bf16.mxu0 0
    %171 = vmatpush1.bf16.msra.mxu0 0
    %172 = vmatprep.subr.bf16.mxu0 0
    %173 = vmatpush1.bf16.msra.mxu0 0
    %174 = vmatprep.subr.bf16.mxu0 0
    %175 = vmatpush1.bf16.msra.mxu0 0
    %176 = vmatprep.subr.bf16.mxu0 0
    %177 = vmatpush1.bf16.msra.mxu0 0
    %178 = vmatprep.subr.bf16.mxu0 0
    %179 = vmatpush1.bf16.msra.mxu0 0
    %180 = vmatprep.subr.bf16.mxu0 0
    %181 = vmatpush1.bf16.msra.mxu0 0
    %182 = vmatprep.subr.bf16.mxu0 0
    %183 = vmatpush1.bf16.msra.mxu0 0
    %184 = vmatprep.subr.bf16.mxu0 0
    %185 = vmatpush1.bf16.msra.mxu0 0
    %186 = vmatprep.subr.bf16.mxu0 0
    %187 = vmatpush1.bf16.msra.mxu0 0
    %188 = vmatprep.subr.bf16.mxu0 0
    %189 = vmatpush1.bf16.msra.mxu0 0
    %190 = vmatprep.subr.bf16.mxu0 0
    %191 = vmatpush1.bf16.msra.mxu0 0
    %192 = vmatprep.subr.bf16.mxu0 0
    %193 = vmatpush1.bf16.msra.mxu0 0
    %194 = vmatprep.subr.bf16.mxu0 0
    %195 = vmatpush1.bf16.msra.mxu0 0
    %196 = vmatprep.subr.bf16.mxu0 0
    %197 = vmatpush1.bf16.msra.mxu0 0
    %198 = vmatprep.subr.bf16.mxu0 0
    %199 = vmatpush1.bf16.msra.mxu0 0
    %200 = vmatprep.mubr.bf16.mxu0 0
    %201 = vmatmul.mubr.bf16.gmra.mrb[0].mxu0 %v162
    %v202 = vpop.f32.mrb[0].mxu0
    %v203 = vadd.f32 0.0, %v202
    %v204 = vpop.f32.mrb[0].mxu0
    %v205 = vpop.f32.mrb[0].mxu0
    %v206 = vpop.f32.mrb[0].mxu0
    %207 = vdwg.mxu0
    %v208 = vxor.u32 %v203, 2147483648
    %v209 = vmul.f32 %v208, 1.442695
    %v210 = vpow.pop %v209
    %v211 = vadd.f32 %v210, 1.0
    %v212 = vrcp.pop %v211
    %v213 = vmul.f32 1.0, %v212
    %v215 = vrot.slane %v213, 1
    %v218 = vmul.f32 %v70, %v213
    %v219 = vmul.f32 %v71, %v215
    %v220 = vpack.c.bf16 %v218, %v218
    %v221 = vpack.c.bf16 %v219, %v219
    %v222 = vld [vmem:[%s3] sm:$0xff]
    %v223 = vld [vmem:[%s3 + $0x8] sm:$0xff]
    %v224 = vld [vmem:[%s3 + $0x10] sm:$0xff]
    %v225 = vld [vmem:[%s3 + $0x18] sm:$0xff]
    %v226 = vld [vmem:[%s3 + $0x20] sm:$0xff]
    %v227 = vld [vmem:[%s3 + $0x28] sm:$0xff]
    %v228 = vld [vmem:[%s3 + $0x30] sm:$0xff]
    %v229 = vld [vmem:[%s3 + $0x38] sm:$0xff]
    %v230 = vld [vmem:[%s3 + $0x40] sm:$0xff]
    %v231 = vld [vmem:[%s3 + $0x48] sm:$0xff]
    %v232 = vld [vmem:[%s3 + $0x50] sm:$0xff]
    %v233 = vld [vmem:[%s3 + $0x58] sm:$0xff]
    %v234 = vld [vmem:[%s3 + $0x60] sm:$0xff]
    %v235 = vld [vmem:[%s3 + $0x68] sm:$0xff]
    %v236 = vld [vmem:[%s3 + $0x70] sm:$0xff]
    %v237 = vld [vmem:[%s3 + $0x78] sm:$0xff]
    %v238 = vld [vmem:[%s4] sm:$0xf]
    %v240 = vlaneseq
    %v241 = vshrl.u32 %v240, 7
    %v242 = vsub.s32 0, %v241
    %v243 = vrot.slane %v238, %v242
    %v244 = vlaneseq
    %v245 = vshrl.u32 %v244, 7
    %v246 = vsub.s32 1, %v245
    %v247 = vrot.slane %v238, %v246
    %v248 = vlaneseq
    %v249 = vshrl.u32 %v248, 7
    %v250 = vsub.s32 2, %v249
    %v251 = vrot.slane %v238, %v250
    %v252 = vlaneseq
    %v253 = vshrl.u32 %v252, 7
    %v254 = vsub.s32 3, %v253
    %v255 = vrot.slane %v238, %v254
    %v262 = vunpack.c.l.b16 %v220
    %v263 = vunpack.c.l.b16 %v221
    %v264 = vrot.slane %v263, 7
    %v265 = vsel %vm86, %v264, %v262
    %v266 = vpack.c.b16 %v265, %v265
    %v283 = vunpack.c.l.b16 %v222
    %v284 = vunpack.c.h.b16 %v222
    %v285 = vunpack.c.l.b16 %v223
    %v286 = vunpack.c.h.b16 %v223
    %v287 = vunpack.c.l.b16 %v224
    %v288 = vunpack.c.h.b16 %v224
    %v289 = vunpack.c.l.b16 %v225
    %v290 = vunpack.c.h.b16 %v225
    %v291 = vunpack.c.l.b16 %v226
    %v292 = vunpack.c.h.b16 %v226
    %v293 = vunpack.c.l.b16 %v227
    %v294 = vunpack.c.h.b16 %v227
    %v295 = vunpack.c.l.b16 %v228
    %v296 = vunpack.c.h.b16 %v228
    %v297 = vunpack.c.l.b16 %v229
    %v298 = vunpack.c.h.b16 %v229
    %v299 = vunpack.c.l.b16 %v230
    %v300 = vunpack.c.h.b16 %v230
    %v301 = vunpack.c.l.b16 %v231
    %v302 = vunpack.c.h.b16 %v231
    %v303 = vunpack.c.l.b16 %v232
    %v304 = vunpack.c.h.b16 %v232
    %v305 = vunpack.c.l.b16 %v233
    %v306 = vunpack.c.h.b16 %v233
    %v307 = vunpack.c.l.b16 %v234
    %v308 = vunpack.c.h.b16 %v234
    %v309 = vunpack.c.l.b16 %v235
    %v310 = vunpack.c.h.b16 %v235
    %v311 = vunpack.c.l.b16 %v236
    %v312 = vunpack.c.h.b16 %v236
    %v313 = vunpack.c.l.b16 %v237
    %v314 = vunpack.c.h.b16 %v237
    %v315 = vpack.c.b16 %v287, %v283
    %v316 = vpack.c.b16 %v288, %v284
    %v317 = vpack.c.b16 %v289, %v285
    %v318 = vpack.c.b16 %v290, %v286
    %v319 = vpack.c.b16 %v295, %v291
    %v320 = vpack.c.b16 %v296, %v292
    %v321 = vpack.c.b16 %v297, %v293
    %v322 = vpack.c.b16 %v298, %v294
    %v323 = vpack.c.b16 %v303, %v299
    %v324 = vpack.c.b16 %v304, %v300
    %v325 = vpack.c.b16 %v305, %v301
    %v326 = vpack.c.b16 %v306, %v302
    %v327 = vpack.c.b16 %v311, %v307
    %v328 = vpack.c.b16 %v312, %v308
    %v329 = vpack.c.b16 %v313, %v309
    %v330 = vpack.c.b16 %v314, %v310
    %v348 = vsel %vm113, %v266, 0
    %350 = vmatprep.subr.bf16.mxu0 %v316
    %351 = vmatpush1.bf16.msra.mxu0 %v315
    %352 = vmatprep.subr.bf16.mxu0 %v320
    %353 = vmatpush1.bf16.msra.mxu0 %v319
    %354 = vmatprep.subr.bf16.mxu0 %v324
    %355 = vmatpush1.bf16.msra.mxu0 %v323
    %356 = vmatprep.subr.bf16.mxu0 %v328
    %357 = vmatpush1.bf16.msra.mxu0 %v327
    %358 = vmatprep.subr.bf16.mxu0 0
    %359 = vmatpush1.bf16.msra.mxu0 0
    %360 = vmatprep.subr.bf16.mxu0 0
    %361 = vmatpush1.bf16.msra.mxu0 0
    %362 = vmatprep.subr.bf16.mxu0 0
    %363 = vmatpush1.bf16.msra.mxu0 0
    %364 = vmatprep.subr.bf16.mxu0 0
    %365 = vmatpush1.bf16.msra.mxu0 0
    %366 = vmatprep.subr.bf16.mxu0 0
    %367 = vmatpush1.bf16.msra.mxu0 0
    %368 = vmatprep.subr.bf16.mxu0 0
    %369 = vmatpush1.bf16.msra.mxu0 0
    %370 = vmatprep.subr.bf16.mxu0 0
    %371 = vmatpush1.bf16.msra.mxu0 0
    %372 = vmatprep.subr.bf16.mxu0 0
    %373 = vmatpush1.bf16.msra.mxu0 0
    %374 = vmatprep.subr.bf16.mxu0 0
    %375 = vmatpush1.bf16.msra.mxu0 0
    %376 = vmatprep.subr.bf16.mxu0 0
    %377 = vmatpush1.bf16.msra.mxu0 0
    %378 = vmatprep.subr.bf16.mxu0 0
    %379 = vmatpush1.bf16.msra.mxu0 0
    %380 = vmatprep.subr.bf16.mxu0 0
    %381 = vmatpush1.bf16.msra.mxu0 0
    %382 = vmatprep.mubr.bf16.mxu0 0
    %383 = vmatmul.mubr.bf16.gmra.mrb[0].mxu0 %v348
    %v384 = vpop.f32.mrb[0].mxu0
    %v385 = vadd.f32 %v243, %v384
    %v386 = vpop.f32.mrb[0].mxu0
    %v387 = vadd.f32 %v247, %v386
    %v388 = vpop.f32.mrb[0].mxu0
    %v389 = vpop.f32.mrb[0].mxu0
    %390 = vdwg.mxu0
    %391 = vmatprep.subr.bf16.mxu0 %v318
    %392 = vmatpush1.bf16.msra.mxu0 %v317
    %393 = vmatprep.subr.bf16.mxu0 %v322
    %394 = vmatpush1.bf16.msra.mxu0 %v321
    %395 = vmatprep.subr.bf16.mxu0 %v326
    %396 = vmatpush1.bf16.msra.mxu0 %v325
    %397 = vmatprep.subr.bf16.mxu0 %v330
    %398 = vmatpush1.bf16.msra.mxu0 %v329
    %399 = vmatprep.subr.bf16.mxu0 0
    %400 = vmatpush1.bf16.msra.mxu0 0
    %401 = vmatprep.subr.bf16.mxu0 0
    %402 = vmatpush1.bf16.msra.mxu0 0
    %403 = vmatprep.subr.bf16.mxu0 0
    %404 = vmatpush1.bf16.msra.mxu0 0
    %405 = vmatprep.subr.bf16.mxu0 0
    %406 = vmatpush1.bf16.msra.mxu0 0
    %407 = vmatprep.subr.bf16.mxu0 0
    %408 = vmatpush1.bf16.msra.mxu0 0
    %409 = vmatprep.subr.bf16.mxu0 0
    %410 = vmatpush1.bf16.msra.mxu0 0
    %411 = vmatprep.subr.bf16.mxu0 0
    %412 = vmatpush1.bf16.msra.mxu0 0
    %413 = vmatprep.subr.bf16.mxu0 0
    %414 = vmatpush1.bf16.msra.mxu0 0
    %415 = vmatprep.subr.bf16.mxu0 0
    %416 = vmatpush1.bf16.msra.mxu0 0
    %417 = vmatprep.subr.bf16.mxu0 0
    %418 = vmatpush1.bf16.msra.mxu0 0
    %419 = vmatprep.subr.bf16.mxu0 0
    %420 = vmatpush1.bf16.msra.mxu0 0
    %421 = vmatprep.subr.bf16.mxu0 0
    %422 = vmatpush1.bf16.msra.mxu0 0
    %423 = vmatprep.mubr.bf16.mxu0 0
    %424 = vmatmul.mubr.bf16.gmra.mrb[0].mxu0 %v348
    %v425 = vpop.f32.mrb[0].mxu0
    %v426 = vadd.f32 %v251, %v425
    %v427 = vpop.f32.mrb[0].mxu0
    %v428 = vadd.f32 %v255, %v427
    %v429 = vpop.f32.mrb[0].mxu0
    %v430 = vpop.f32.mrb[0].mxu0
    %431 = vdwg.mxu0
    %v432 = vmax.f32 %v385, 0.0
    %v433 = vmax.f32 %v387, 0.0
    %v434 = vmax.f32 %v426, 0.0
    %v435 = vmax.f32 %v428, 0.0
    %v436 = vpack.c.bf16 %v432, %v432
    %v437 = vpack.c.bf16 %v433, %v433
    %v438 = vpack.c.bf16 %v434, %v434
    %v439 = vpack.c.bf16 %v435, %v435
    %v440 = vld [vmem:[%s5] sm:$0xf]
    %v441 = vld [vmem:[%s5 + $0x4] sm:$0xf]
    %v442 = vld [vmem:[%s5 + $0x8] sm:$0xf]
    %v443 = vld [vmem:[%s5 + $0xc] sm:$0xf]
    %v444 = vld [vmem:[%s5 + $0x10] sm:$0xf]
    %v445 = vld [vmem:[%s5 + $0x14] sm:$0xf]
    %v446 = vld [vmem:[%s5 + $0x18] sm:$0xf]
    %v447 = vld [vmem:[%s5 + $0x1c] sm:$0xf]
    %v448 = vld [vmem:[%s5 + $0x20] sm:$0xf]
    %v449 = vld [vmem:[%s5 + $0x24] sm:$0xf]
    %v450 = vld [vmem:[%s5 + $0x28] sm:$0xf]
    %v451 = vld [vmem:[%s5 + $0x2c] sm:$0xf]
    %v452 = vld [vmem:[%s5 + $0x30] sm:$0xf]
    %v453 = vld [vmem:[%s5 + $0x34] sm:$0xf]
    %v454 = vld [vmem:[%s5 + $0x38] sm:$0xf]
    %v455 = vld [vmem:[%s5 + $0x3c] sm:$0xf]
    %v456 = vld [vmem:[%s5 + $0x40] sm:$0xf]
    %v457 = vld [vmem:[%s5 + $0x44] sm:$0xf]
    %v458 = vld [vmem:[%s5 + $0x48] sm:$0xf]
    %v459 = vld [vmem:[%s5 + $0x4c] sm:$0xf]
    %v460 = vld [vmem:[%s5 + $0x50] sm:$0xf]
    %v461 = vld [vmem:[%s5 + $0x54] sm:$0xf]
    %v462 = vld [vmem:[%s5 + $0x58] sm:$0xf]
    %v463 = vld [vmem:[%s5 + $0x5c] sm:$0xf]
    %v464 = vld [vmem:[%s5 + $0x60] sm:$0xf]
    %v465 = vld [vmem:[%s5 + $0x64] sm:$0xf]
    %v466 = vld [vmem:[%s5 + $0x68] sm:$0xf]
    %v467 = vld [vmem:[%s5 + $0x6c] sm:$0xf]
    %v468 = vld [vmem:[%s5 + $0x70] sm:$0xf]
    %v469 = vld [vmem:[%s5 + $0x74] sm:$0xf]
    %v470 = vld [vmem:[%s5 + $0x78] sm:$0xf]
    %v471 = vld [vmem:[%s5 + $0x7c] sm:$0xf]
    %v472 = vld [vmem:[%s5 + $0x80] sm:$0xf]
    %v473 = vld [vmem:[%s5 + $0x84] sm:$0xf]
    %v474 = vld [vmem:[%s5 + $0x88] sm:$0xf]
    %v475 = vld [vmem:[%s5 + $0x8c] sm:$0xf]
    %v476 = vld [vmem:[%s5 + $0x90] sm:$0xf]
    %v477 = vld [vmem:[%s5 + $0x94] sm:$0xf]
    %v478 = vld [vmem:[%s5 + $0x98] sm:$0xf]
    %v479 = vld [vmem:[%s5 + $0x9c] sm:$0xf]
    %v480 = vld [vmem:[%s5 + $0xa0] sm:$0xf]
    %v481 = vld [vmem:[%s5 + $0xa4] sm:$0xf]
    %v482 = vld [vmem:[%s5 + $0xa8] sm:$0xf]
    %v483 = vld [vmem:[%s5 + $0xac] sm:$0xf]
    %v484 = vld [vmem:[%s5 + $0xb0] sm:$0xf]
    %v485 = vld [vmem:[%s5 + $0xb4] sm:$0xf]
    %v486 = vld [vmem:[%s5 + $0xb8] sm:$0xf]
    %v487 = vld [vmem:[%s5 + $0xbc] sm:$0xf]
    %v488 = vld [vmem:[%s5 + $0xc0] sm:$0xf]
    %v489 = vld [vmem:[%s5 + $0xc4] sm:$0xf]
    %v490 = vld [vmem:[%s5 + $0xc8] sm:$0xf]
    %v491 = vld [vmem:[%s5 + $0xcc] sm:$0xf]
    %v492 = vld [vmem:[%s5 + $0xd0] sm:$0xf]
    %v493 = vld [vmem:[%s5 + $0xd4] sm:$0xf]
    %v494 = vld [vmem:[%s5 + $0xd8] sm:$0xf]
    %v495 = vld [vmem:[%s5 + $0xdc] sm:$0xf]
    %v496 = vld [vmem:[%s5 + $0xe0] sm:$0xf]
    %v497 = vld [vmem:[%s5 + $0xe4] sm:$0xf]
    %v498 = vld [vmem:[%s5 + $0xe8] sm:$0xf]
    %v499 = vld [vmem:[%s5 + $0xec] sm:$0xf]
    %v500 = vld [vmem:[%s5 + $0xf0] sm:$0xf]
    %v501 = vld [vmem:[%s5 + $0xf4] sm:$0xf]
    %v502 = vld [vmem:[%s5 + $0xf8] sm:$0xf]
    %v503 = vld [vmem:[%s5 + $0xfc] sm:$0xf]
    %v504 = vld [vmem:[%s6] sm:$0x1]
    %v506 = vlaneseq
    %v507 = vshrl.u32 %v506, 7
    %v508 = vsub.s32 0, %v507
    %v509 = vrot.slane %v504, %v508
    %v575 = vunpack.c.l.b16 %v440
    %v576 = vunpack.c.l.b16 %v441
    %v577 = vunpack.c.l.b16 %v442
    %v578 = vunpack.c.l.b16 %v443
    %v579 = vunpack.c.l.b16 %v444
    %v580 = vunpack.c.l.b16 %v445
    %v581 = vunpack.c.l.b16 %v446
    %v582 = vunpack.c.l.b16 %v447
    %v583 = vunpack.c.l.b16 %v448
    %v584 = vunpack.c.l.b16 %v449
    %v585 = vunpack.c.l.b16 %v450
    %v586 = vunpack.c.l.b16 %v451
    %v587 = vunpack.c.l.b16 %v452
    %v588 = vunpack.c.l.b16 %v453
    %v589 = vunpack.c.l.b16 %v454
    %v590 = vunpack.c.l.b16 %v455
    %v591 = vunpack.c.l.b16 %v456
    %v592 = vunpack.c.l.b16 %v457
    %v593 = vunpack.c.l.b16 %v458
    %v594 = vunpack.c.l.b16 %v459
    %v595 = vunpack.c.l.b16 %v460
    %v596 = vunpack.c.l.b16 %v461
    %v597 = vunpack.c.l.b16 %v462
    %v598 = vunpack.c.l.b16 %v463
    %v599 = vunpack.c.l.b16 %v464
    %v600 = vunpack.c.l.b16 %v465
    %v601 = vunpack.c.l.b16 %v466
    %v602 = vunpack.c.l.b16 %v467
    %v603 = vunpack.c.l.b16 %v468
    %v604 = vunpack.c.l.b16 %v469
    %v605 = vunpack.c.l.b16 %v470
    %v606 = vunpack.c.l.b16 %v471
    %v607 = vunpack.c.l.b16 %v472
    %v608 = vunpack.c.l.b16 %v473
    %v609 = vunpack.c.l.b16 %v474
    %v610 = vunpack.c.l.b16 %v475
    %v611 = vunpack.c.l.b16 %v476
    %v612 = vunpack.c.l.b16 %v477
    %v613 = vunpack.c.l.b16 %v478
    %v614 = vunpack.c.l.b16 %v479
    %v615 = vunpack.c.l.b16 %v480
    %v616 = vunpack.c.l.b16 %v481
    %v617 = vunpack.c.l.b16 %v482
    %v618 = vunpack.c.l.b16 %v483
    %v619 = vunpack.c.l.b16 %v484
    %v620 = vunpack.c.l.b16 %v485
    %v621 = vunpack.c.l.b16 %v486
    %v622 = vunpack.c.l.b16 %v487
    %v623 = vunpack.c.l.b16 %v488
    %v624 = vunpack.c.l.b16 %v489
    %v625 = vunpack.c.l.b16 %v490
    %v626 = vunpack.c.l.b16 %v491
    %v627 = vunpack.c.l.b16 %v492
    %v628 = vunpack.c.l.b16 %v493
    %v629 = vunpack.c.l.b16 %v494
    %v630 = vunpack.c.l.b16 %v495
    %v631 = vunpack.c.l.b16 %v496
    %v632 = vunpack.c.l.b16 %v497
    %v633 = vunpack.c.l.b16 %v498
    %v634 = vunpack.c.l.b16 %v499
    %v635 = vunpack.c.l.b16 %v500
    %v636 = vunpack.c.l.b16 %v501
    %v637 = vunpack.c.l.b16 %v502
    %v638 = vunpack.c.l.b16 %v503
    %v639 = vpack.c.b16 %v576, %v575
    %v640 = vpack.c.b16 %v578, %v577
    %v641 = vpack.c.b16 %v580, %v579
    %v642 = vpack.c.b16 %v582, %v581
    %v643 = vpack.c.b16 %v584, %v583
    %v644 = vpack.c.b16 %v586, %v585
    %v645 = vpack.c.b16 %v588, %v587
    %v646 = vpack.c.b16 %v590, %v589
    %v647 = vpack.c.b16 %v592, %v591
    %v648 = vpack.c.b16 %v594, %v593
    %v649 = vpack.c.b16 %v596, %v595
    %v650 = vpack.c.b16 %v598, %v597
    %v651 = vpack.c.b16 %v600, %v599
    %v652 = vpack.c.b16 %v602, %v601
    %v653 = vpack.c.b16 %v604, %v603
    %v654 = vpack.c.b16 %v606, %v605
    %v655 = vpack.c.b16 %v608, %v607
    %v656 = vpack.c.b16 %v610, %v609
    %v657 = vpack.c.b16 %v612, %v611
    %v658 = vpack.c.b16 %v614, %v613
    %v659 = vpack.c.b16 %v616, %v615
    %v660 = vpack.c.b16 %v618, %v617
    %v661 = vpack.c.b16 %v620, %v619
    %v662 = vpack.c.b16 %v622, %v621
    %v663 = vpack.c.b16 %v624, %v623
    %v664 = vpack.c.b16 %v626, %v625
    %v665 = vpack.c.b16 %v628, %v627
    %v666 = vpack.c.b16 %v630, %v629
    %v667 = vpack.c.b16 %v632, %v631
    %v668 = vpack.c.b16 %v634, %v633
    %v669 = vpack.c.b16 %v636, %v635
    %v670 = vpack.c.b16 %v638, %v637
    %703 = vmatprep.subr.bf16.mxu0 0
    %704 = vmatpush1.bf16.msra.mxu0 %v639
    %705 = vmatprep.subr.bf16.mxu0 0
    %706 = vmatpush1.bf16.msra.mxu0 %v640
    %707 = vmatprep.subr.bf16.mxu0 0
    %708 = vmatpush1.bf16.msra.mxu0 %v641
    %709 = vmatprep.subr.bf16.mxu0 0
    %710 = vmatpush1.bf16.msra.mxu0 %v642
    %711 = vmatprep.subr.bf16.mxu0 0
    %712 = vmatpush1.bf16.msra.mxu0 %v643
    %713 = vmatprep.subr.bf16.mxu0 0
    %714 = vmatpush1.bf16.msra.mxu0 %v644
    %715 = vmatprep.subr.bf16.mxu0 0
    %716 = vmatpush1.bf16.msra.mxu0 %v645
    %717 = vmatprep.subr.bf16.mxu0 0
    %718 = vmatpush1.bf16.msra.mxu0 %v646
    %719 = vmatprep.subr.bf16.mxu0 0
    %720 = vmatpush1.bf16.msra.mxu0 %v647
    %721 = vmatprep.subr.bf16.mxu0 0
    %722 = vmatpush1.bf16.msra.mxu0 %v648
    %723 = vmatprep.subr.bf16.mxu0 0
    %724 = vmatpush1.bf16.msra.mxu0 %v649
    %725 = vmatprep.subr.bf16.mxu0 0
    %726 = vmatpush1.bf16.msra.mxu0 %v650
    %727 = vmatprep.subr.bf16.mxu0 0
    %728 = vmatpush1.bf16.msra.mxu0 %v651
    %729 = vmatprep.subr.bf16.mxu0 0
    %730 = vmatpush1.bf16.msra.mxu0 %v652
    %731 = vmatprep.subr.bf16.mxu0 0
    %732 = vmatpush1.bf16.msra.mxu0 %v653
    %733 = vmatprep.subr.bf16.mxu0 0
    %734 = vmatpush1.bf16.msra.mxu0 %v654
    %735 = vmatprep.mubr.bf16.mxu0 %v437
    %736 = vmatmul.mubr.bf16.gmra.mrb[0].mxu0 %v436
    %v737 = vpop.f32.mrb[0].mxu0
    %v738 = vadd.f32 %v509, %v737
    %v739 = vpop.f32.mrb[0].mxu0
    %v740 = vpop.f32.mrb[0].mxu0
    %v741 = vpop.f32.mrb[0].mxu0
    %742 = vdwg.mxu0
    %743 = vmatprep.subr.bf16.mxu0 0
    %744 = vmatpush1.bf16.msra.mxu0 %v655
    %745 = vmatprep.subr.bf16.mxu0 0
    %746 = vmatpush1.bf16.msra.mxu0 %v656
    %747 = vmatprep.subr.bf16.mxu0 0
    %748 = vmatpush1.bf16.msra.mxu0 %v657
    %749 = vmatprep.subr.bf16.mxu0 0
    %750 = vmatpush1.bf16.msra.mxu0 %v658
    %751 = vmatprep.subr.bf16.mxu0 0
    %752 = vmatpush1.bf16.msra.mxu0 %v659
    %753 = vmatprep.subr.bf16.mxu0 0
    %754 = vmatpush1.bf16.msra.mxu0 %v660
    %755 = vmatprep.subr.bf16.mxu0 0
    %756 = vmatpush1.bf16.msra.mxu0 %v661
    %757 = vmatprep.subr.bf16.mxu0 0
    %758 = vmatpush1.bf16.msra.mxu0 %v662
    %759 = vmatprep.subr.bf16.mxu0 0
    %760 = vmatpush1.bf16.msra.mxu0 %v663
    %761 = vmatprep.subr.bf16.mxu0 0
    %762 = vmatpush1.bf16.msra.mxu0 %v664
    %763 = vmatprep.subr.bf16.mxu0 0
    %764 = vmatpush1.bf16.msra.mxu0 %v665
    %765 = vmatprep.subr.bf16.mxu0 0
    %766 = vmatpush1.bf16.msra.mxu0 %v666
    %767 = vmatprep.subr.bf16.mxu0 0
    %768 = vmatpush1.bf16.msra.mxu0 %v667
    %769 = vmatprep.subr.bf16.mxu0 0
    %770 = vmatpush1.bf16.msra.mxu0 %v668
    %771 = vmatprep.subr.bf16.mxu0 0
    %772 = vmatpush1.bf16.msra.mxu0 %v669
    %773 = vmatprep.subr.bf16.mxu0 0
    %774 = vmatpush1.bf16.msra.mxu0 %v670
    %775 = vmatprep.mubr.bf16.mxu0 %v439
    %776 = vmatmul.mubr.bf16.gmra.mrb[0].mxu0 %v438
    %v777 = vpop.f32.mrb[0].mxu0
    %v778 = vadd.f32 %v738, %v777
    %v779 = vpop.f32.mrb[0].mxu0
    %v780 = vpop.f32.mrb[0].mxu0
    %v781 = vpop.f32.mrb[0].mxu0
    %782 = vdwg.mxu0
    %783 = vst [vmem:[#allocation2] sm:$0x3] %v778
    // Predicated region
    $region37: #{tpu_custom_call.1} parent=1 // pred_check
      _
    $region38: #{tpu_custom_call.1} parent=1 // pred_check_branch
      %785 = sbr.rel (0) target = $region40
    $region39: #{tpu_custom_call.1} parent=1 // pred_region
      %s787 = ssub.s32 32, 32
      %788 = vsyncadd [#allocation3], %s787
      %s790 = sshll.u32 [#allocation2], 4
      %s791 = int_to_ptr.vmem [resolvable:$true] %s790
      %793 = dma.vmem_to_hbm [thread:$0]  %s791, 32, %s7, [#allocation3]
    $region40: #{tpu_custom_call.1} parent=1 // pred_fallthru
      _
    // Predicated region
    $region41: #{tpu_custom_call.1} parent=1 // pred_check
      _
    $region42: #{tpu_custom_call.1} parent=1 // pred_check_branch
      %795 = sbr.rel (0) target = $region44
    $region43: #{tpu_custom_call.1} parent=1 // pred_region
      %796 = dma.done [#allocation3], 32
    $region44: #{tpu_custom_call.1} parent=1 // pred_fallthru
      _
    %797 = vsyncpa [#allocation3], 1

</llo_original>
